<compile_context>
chip_gen: v6e
topology: v6e:2x2x1
jax: 0.10.0
libtpu: 0.0.40
codegen_flags: <defaults>
</compile_context>

<pallas_src>
import math

import jax
import jax.numpy as jnp
from jax.experimental import pallas as pl
from jax.experimental.pallas import tpu as pltpu


def _make_cross_attention_kernel(*, n_head: int, head_dim: int,
                                 B: int, T: int, I: int, C: int):
    scale = 1.0 / math.sqrt(head_dim)
    H, hd = n_head, head_dim

    def kernel(x_ref, enc_ref, w_ref, b_ref, o_ref):
        # x_ref:   (B, T, C)
        # enc_ref: (B, I, C)
        # w_ref:   (C, 4C) = [Wq^T | Wk^T | Wv^T | Wo^T]
        # b_ref:   (1, 4C) = [bq   | bk   | bv   | bo  ]
        # o_ref:   (B*T, C)
        w = w_ref[...]
        b = b_ref[...]

        # Layout-trivial flatten of the batch dim (T is a sublane multiple of 8).
        x2 = x_ref[...].reshape(B * T, C)       # (BT, C)
        enc2 = enc_ref[...].reshape(B * I, C)   # (BI, C)

        # Fused projections: 2 wide MXU launches instead of 12 tiny ones.
        q = jnp.dot(x2, w[:, 0:C],
                    preferred_element_type=jnp.float32) + b[:, 0:C]          # (BT, C)
        kv = jnp.dot(enc2, w[:, C:3 * C],
                     preferred_element_type=jnp.float32) + b[:, C:3 * C]      # (BI, 2C)

        q3 = q.reshape(B, T, C)
        k3 = kv[:, 0:C].reshape(B, I, C)
        v3 = kv[:, C:2 * C].reshape(B, I, C)

        # Per-head attention with batched contractions (no cross-batch work,
        # no mask).  Head slices are cheap lane selects (XLU slot is idle).
        heads = []
        for h in range(H):
            sl = slice(h * hd, (h + 1) * hd)
            qh = q3[:, :, sl] * scale                                         # (B, T, hd)
            kh = k3[:, :, sl]                                                 # (B, I, hd)
            vh = v3[:, :, sl]                                                 # (B, I, hd)

            s = jnp.einsum('btd,bid->bti', qh, kh,
                           preferred_element_type=jnp.float32)                # (B, T, I)
            m = jnp.max(s, axis=-1, keepdims=True)
            e = jnp.exp(s - m)
            p = e / jnp.sum(e, axis=-1, keepdims=True)                        # exact softmax

            heads.append(jnp.einsum('bti,bid->btd', p, vh,
                                    preferred_element_type=jnp.float32))      # (B, T, hd)

        # Concatenate heads along lanes -> (B, T, C) and do one output matmul.
        y = jnp.concatenate(heads, axis=-1).reshape(B * T, C)                 # (BT, C)
        out = jnp.dot(y, w[:, 3 * C:4 * C],
                      preferred_element_type=jnp.float32) + b[:, 3 * C:4 * C]

        o_ref[...] = out.astype(o_ref.dtype)

    return kernel


def cross_attention(x, encoder_output, params, *, n_head: int):
    """Pallas implementation of Cross_Attention.forward.

    x:              (B, T, C) float32
    encoder_output: (B, I, C) float32
    params: dict with wq (C,C), bq (C,), wkv (2C,C), bkv (2C,), wo (C,C), bo (C,)
    """
    B, T, C = x.shape
    Bi, I, Ci = encoder_output.shape
    assert B == Bi and C == Ci and C % n_head == 0
    hd = C // n_head

    wq, bq = params["wq"], params["bq"]
    wkv, bkv = params["wkv"], params["bkv"]
    wo, bo = params["wo"], params["bo"]

    # One-time wrapper-side re-layout: pack all weights into a single lane-dense
    # (C, 4C) slab (4C == 128 here) and all biases into one (1, 4C) row.
    w_pack = jnp.concatenate([wq.T, wkv.T, wo.T], axis=1)       # (C, 4C)
    b_pack = jnp.concatenate([bq, bkv, bo]).reshape(1, 4 * C)   # (1, 4C)

    kernel = _make_cross_attention_kernel(n_head=n_head, head_dim=hd,
                                          B=B, T=T, I=I, C=C)

    grid_spec = pltpu.PrefetchScalarGridSpec(
        num_scalar_prefetch=0,
        grid=(1,),
        in_specs=[
            pl.BlockSpec((B, T, C), lambda i: (0, 0, 0)),     # x
            pl.BlockSpec((B, I, C), lambda i: (0, 0, 0)),     # encoder_output
            pl.BlockSpec((C, 4 * C), lambda i: (0, 0)),       # packed weights
            pl.BlockSpec((1, 4 * C), lambda i: (0, 0)),       # packed biases
        ],
        out_specs=pl.BlockSpec((B * T, C), lambda i: (0, 0)),
    )

    out2 = pl.pallas_call(
        kernel,
        out_shape=jax.ShapeDtypeStruct((B * T, C), x.dtype),
        grid_spec=grid_spec,
        compiler_params=pltpu.CompilerParams(
            dimension_semantics=("arbitrary",)),
    )(x, encoder_output, w_pack, b_pack)

    return out2.reshape(B, T, C)


def cross_attention_ref(x, encoder_output, params, *, n_head: int):
    """Pure-JAX reference mirroring the PyTorch forward exactly."""
    B, T, C = x.shape
    _, I, _ = encoder_output.shape
    hd = C // n_head
    q = x @ params["wq"].T + params["bq"]
    kv = encoder_output @ params["wkv"].T + params["bkv"]
    k, v = kv[..., :C], kv[..., C:]
    q = q.reshape(B, T, n_head, hd).transpose(0, 2, 1, 3)
    k = k.reshape(B, I, n_head, hd).transpose(0, 2, 1, 3)
    v = v.reshape(B, I, n_head, hd).transpose(0, 2, 1, 3)
    att = (q @ k.transpose(0, 1, 3, 2)) * (1.0 / math.sqrt(hd))
    att = jax.nn.softmax(att, axis=-1)
    y = (att @ v).transpose(0, 2, 1, 3).reshape(B, T, C)
    return y @ params["wo"].T + params["bo"]


if __name__ == "__main__":
    # cfg: n_embd=32, n_head=4, block_size=16 (causal buffer unused in forward)
    B, T, I, C, H = 2, 8, 8, 32, 4

    key = jax.random.PRNGKey(0)
    ks = jax.random.split(key, 8)
    bound = 1.0 / math.sqrt(C)  # PyTorch nn.Linear default init bound
    params = {
        "wq":  jax.random.uniform(ks[0], (C, C),     jnp.float32, -bound, bound),
        "bq":  jax.random.uniform(ks[1], (C,),       jnp.float32, -bound, bound),
        "wkv": jax.random.uniform(ks[2], (2 * C, C), jnp.float32, -bound, bound),
        "bkv": jax.random.uniform(ks[3], (2 * C,),   jnp.float32, -bound, bound),
        "wo":  jax.random.uniform(ks[4], (C, C),     jnp.float32, -bound, bound),
        "bo":  jax.random.uniform(ks[5], (C,),       jnp.float32, -bound, bound),
    }
    x = jax.random.normal(ks[6], (B, T, C), jnp.float32)
    enc = jax.random.normal(ks[7], (B, I, C), jnp.float32)

    out = cross_attention(x, enc, params, n_head=H)
    out = jax.block_until_ready(out)

    ref = cross_attention_ref(x, enc, params, n_head=H)
    assert out.shape == (B, T, C)
    # Exact softmax normalization -> tight parity with the reference.
    assert jnp.allclose(out, ref, rtol=1e-4, atol=1e-5), "mismatch vs reference"

    print("KERNEL_OK")
</pallas_src>

<mosaic_0001>
module attributes {stable_mosaic.version = 11 : i64} {
  func.func @kernel(%arg0: i32, %arg1: memref<2x8x32xf32, #tpu.memory_space<vmem>>, %arg2: memref<2x8x32xf32, #tpu.memory_space<vmem>>, %arg3: memref<32x128xf32, #tpu.memory_space<vmem>>, %arg4: memref<1x128xf32, #tpu.memory_space<vmem>>, %arg5: memref<16x32xf32, #tpu.memory_space<vmem>>) attributes {dimension_semantics = [#tpu.dimension_semantics<arbitrary>], iteration_bounds = array<i64: 1>, scalar_prefetch = 0 : i64, scratch_operands = 0 : i64, tpu.core_type = #tpu.core_type<tc>, window_params = [{pipeline_mode = #tpu.pipeline_mode<synchronous>, transform_indices = @transform_0, window_bounds = array<i64: 2, 8, 32>}, {pipeline_mode = #tpu.pipeline_mode<synchronous>, transform_indices = @transform_1, window_bounds = array<i64: 2, 8, 32>}, {pipeline_mode = #tpu.pipeline_mode<synchronous>, transform_indices = @transform_2, window_bounds = array<i64: 32, 128>}, {pipeline_mode = #tpu.pipeline_mode<synchronous>, transform_indices = @transform_3, window_bounds = array<i64: 1, 128>}, {pipeline_mode = #tpu.pipeline_mode<synchronous>, transform_indices = @transform_4, window_bounds = array<i64: 16, 32>}]} {
    %c0 = arith.constant 0 : index
    %c0_0 = arith.constant 0 : index
    %0 = vector.load %arg3[%c0, %c0_0] : memref<32x128xf32, #tpu.memory_space<vmem>>, vector<32x128xf32>
    %c0_1 = arith.constant 0 : index
    %c0_2 = arith.constant 0 : index
    %1 = vector.load %arg4[%c0_1, %c0_2] : memref<1x128xf32, #tpu.memory_space<vmem>>, vector<1x128xf32>
    %c0_3 = arith.constant 0 : index
    %c0_4 = arith.constant 0 : index
    %c0_5 = arith.constant 0 : index
    %2 = vector.load %arg1[%c0_3, %c0_4, %c0_5] : memref<2x8x32xf32, #tpu.memory_space<vmem>>, vector<2x8x32xf32>
    %3 = vector.shape_cast %2 : vector<2x8x32xf32> to vector<16x32xf32>
    %c0_6 = arith.constant 0 : index
    %c0_7 = arith.constant 0 : index
    %c0_8 = arith.constant 0 : index
    %4 = vector.load %arg2[%c0_6, %c0_7, %c0_8] : memref<2x8x32xf32, #tpu.memory_space<vmem>>, vector<2x8x32xf32>
    %5 = vector.shape_cast %4 : vector<2x8x32xf32> to vector<16x32xf32>
    %6 = vector.extract_strided_slice %0 {offsets = [0, 0], sizes = [32, 32], strides = [1, 1]} : vector<32x128xf32> to vector<32x32xf32>
    %cst = arith.constant dense<0.000000e+00> : vector<16x32xf32>
    %7 = tpu.matmul %3, %6, %cst {dimension_numbers = #tpu.dot_dimension_numbers<[1], [0], [0], [1], [0, 0, 1, 1], [], []>} : vector<16x32xf32>, vector<32x32xf32>, vector<16x32xf32> -> vector<16x32xf32>
    %8 = vector.extract_strided_slice %1 {offsets = [0, 0], sizes = [1, 32], strides = [1, 1]} : vector<1x128xf32> to vector<1x32xf32>
    %9 = vector.broadcast %8 : vector<1x32xf32> to vector<16x32xf32>
    %10 = arith.addf %7, %9 : vector<16x32xf32>
    %11 = vector.extract_strided_slice %0 {offsets = [0, 32], sizes = [32, 64], strides = [1, 1]} : vector<32x128xf32> to vector<32x64xf32>
    %cst_9 = arith.constant dense<0.000000e+00> : vector<16x64xf32>
    %12 = tpu.matmul %5, %11, %cst_9 {dimension_numbers = #tpu.dot_dimension_numbers<[1], [0], [0], [1], [0, 0, 1, 1], [], []>} : vector<16x32xf32>, vector<32x64xf32>, vector<16x64xf32> -> vector<16x64xf32>
    %13 = vector.extract_strided_slice %1 {offsets = [0, 32], sizes = [1, 64], strides = [1, 1]} : vector<1x128xf32> to vector<1x64xf32>
    %14 = vector.broadcast %13 : vector<1x64xf32> to vector<16x64xf32>
    %15 = arith.addf %12, %14 : vector<16x64xf32>
    %16 = vector.shape_cast %10 : vector<16x32xf32> to vector<2x8x32xf32>
    %17 = vector.extract_strided_slice %15 {offsets = [0, 0], sizes = [16, 32], strides = [1, 1]} : vector<16x64xf32> to vector<16x32xf32>
    %18 = vector.shape_cast %17 : vector<16x32xf32> to vector<2x8x32xf32>
    %19 = vector.extract_strided_slice %15 {offsets = [0, 32], sizes = [16, 32], strides = [1, 1]} : vector<16x64xf32> to vector<16x32xf32>
    %20 = vector.shape_cast %19 : vector<16x32xf32> to vector<2x8x32xf32>
    %21 = vector.extract_strided_slice %16 {offsets = [0, 0, 0], sizes = [2, 8, 8], strides = [1, 1, 1]} : vector<2x8x32xf32> to vector<2x8x8xf32>
    %cst_10 = arith.constant 0.353553385 : f32
    %22 = vector.broadcast %cst_10 : f32 to vector<2x8x8xf32>
    %23 = arith.mulf %21, %22 : vector<2x8x8xf32>
    %24 = vector.extract_strided_slice %18 {offsets = [0, 0, 0], sizes = [2, 8, 8], strides = [1, 1, 1]} : vector<2x8x32xf32> to vector<2x8x8xf32>
    %25 = vector.extract_strided_slice %20 {offsets = [0, 0, 0], sizes = [2, 8, 8], strides = [1, 1, 1]} : vector<2x8x32xf32> to vector<2x8x8xf32>
    "tpu.trace_start"() <{level = 10 : i32, message = "btd,bid->bti"}> : () -> ()
    %cst_11 = arith.constant dense<0.000000e+00> : vector<2x8x8xf32>
    %26 = tpu.matmul %23, %24, %cst_11 {dimension_numbers = #tpu.dot_dimension_numbers<[2], [2], [1], [1], [0, 0, 0, 1, 1, 1], [0], [0]>} : vector<2x8x8xf32>, vector<2x8x8xf32>, vector<2x8x8xf32> -> vector<2x8x8xf32>
    "tpu.trace_stop"() : () -> ()
    %cst_12 = arith.constant dense<0xFF800000> : vector<2x8xf32>
    %27 = vector.multi_reduction <maximumf>, %26, %cst_12 [2] : vector<2x8x8xf32> to vector<2x8xf32>
    %28 = vector.shape_cast %27 : vector<2x8xf32> to vector<2x8x1xf32>
    %29 = vector.broadcast %28 : vector<2x8x1xf32> to vector<2x8x8xf32>
    %30 = arith.subf %26, %29 : vector<2x8x8xf32>
    %31 = math.exp %30 : vector<2x8x8xf32>
    %cst_13 = arith.constant dense<0.000000e+00> : vector<2x8xf32>
    %32 = vector.multi_reduction <add>, %31, %cst_13 [2] : vector<2x8x8xf32> to vector<2x8xf32>
    %33 = vector.shape_cast %32 : vector<2x8xf32> to vector<2x8x1xf32>
    %34 = vector.broadcast %33 : vector<2x8x1xf32> to vector<2x8x8xf32>
    %35 = arith.divf %31, %34 : vector<2x8x8xf32>
    "tpu.trace_start"() <{level = 10 : i32, message = "bti,bid->btd"}> : () -> ()
    %cst_14 = arith.constant dense<0.000000e+00> : vector<2x8x8xf32>
    %36 = tpu.matmul %35, %25, %cst_14 {dimension_numbers = #tpu.dot_dimension_numbers<[2], [1], [1], [2], [0, 0, 0, 1, 1, 2], [0], [0]>} : vector<2x8x8xf32>, vector<2x8x8xf32>, vector<2x8x8xf32> -> vector<2x8x8xf32>
    "tpu.trace_stop"() : () -> ()
    %37 = vector.extract_strided_slice %16 {offsets = [0, 0, 8], sizes = [2, 8, 8], strides = [1, 1, 1]} : vector<2x8x32xf32> to vector<2x8x8xf32>
    %cst_15 = arith.constant 0.353553385 : f32
    %38 = vector.broadcast %cst_15 : f32 to vector<2x8x8xf32>
    %39 = arith.mulf %37, %38 : vector<2x8x8xf32>
    %40 = vector.extract_strided_slice %18 {offsets = [0, 0, 8], sizes = [2, 8, 8], strides = [1, 1, 1]} : vector<2x8x32xf32> to vector<2x8x8xf32>
    %41 = vector.extract_strided_slice %20 {offsets = [0, 0, 8], sizes = [2, 8, 8], strides = [1, 1, 1]} : vector<2x8x32xf32> to vector<2x8x8xf32>
    "tpu.trace_start"() <{level = 10 : i32, message = "btd,bid->bti"}> : () -> ()
    %cst_16 = arith.constant dense<0.000000e+00> : vector<2x8x8xf32>
    %42 = tpu.matmul %39, %40, %cst_16 {dimension_numbers = #tpu.dot_dimension_numbers<[2], [2], [1], [1], [0, 0, 0, 1, 1, 1], [0], [0]>} : vector<2x8x8xf32>, vector<2x8x8xf32>, vector<2x8x8xf32> -> vector<2x8x8xf32>
    "tpu.trace_stop"() : () -> ()
    %cst_17 = arith.constant dense<0xFF800000> : vector<2x8xf32>
    %43 = vector.multi_reduction <maximumf>, %42, %cst_17 [2] : vector<2x8x8xf32> to vector<2x8xf32>
    %44 = vector.shape_cast %43 : vector<2x8xf32> to vector<2x8x1xf32>
    %45 = vector.broadcast %44 : vector<2x8x1xf32> to vector<2x8x8xf32>
    %46 = arith.subf %42, %45 : vector<2x8x8xf32>
    %47 = math.exp %46 : vector<2x8x8xf32>
    %cst_18 = arith.constant dense<0.000000e+00> : vector<2x8xf32>
    %48 = vector.multi_reduction <add>, %47, %cst_18 [2] : vector<2x8x8xf32> to vector<2x8xf32>
    %49 = vector.shape_cast %48 : vector<2x8xf32> to vector<2x8x1xf32>
    %50 = vector.broadcast %49 : vector<2x8x1xf32> to vector<2x8x8xf32>
    %51 = arith.divf %47, %50 : vector<2x8x8xf32>
    "tpu.trace_start"() <{level = 10 : i32, message = "bti,bid->btd"}> : () -> ()
    %cst_19 = arith.constant dense<0.000000e+00> : vector<2x8x8xf32>
    %52 = tpu.matmul %51, %41, %cst_19 {dimension_numbers = #tpu.dot_dimension_numbers<[2], [1], [1], [2], [0, 0, 0, 1, 1, 2], [0], [0]>} : vector<2x8x8xf32>, vector<2x8x8xf32>, vector<2x8x8xf32> -> vector<2x8x8xf32>
    "tpu.trace_stop"() : () -> ()
    %53 = vector.extract_strided_slice %16 {offsets = [0, 0, 16], sizes = [2, 8, 8], strides = [1, 1, 1]} : vector<2x8x32xf32> to vector<2x8x8xf32>
    %cst_20 = arith.constant 0.353553385 : f32
    %54 = vector.broadcast %cst_20 : f32 to vector<2x8x8xf32>
    %55 = arith.mulf %53, %54 : vector<2x8x8xf32>
    %56 = vector.extract_strided_slice %18 {offsets = [0, 0, 16], sizes = [2, 8, 8], strides = [1, 1, 1]} : vector<2x8x32xf32> to vector<2x8x8xf32>
    %57 = vector.extract_strided_slice %20 {offsets = [0, 0, 16], sizes = [2, 8, 8], strides = [1, 1, 1]} : vector<2x8x32xf32> to vector<2x8x8xf32>
    "tpu.trace_start"() <{level = 10 : i32, message = "btd,bid->bti"}> : () -> ()
    %cst_21 = arith.constant dense<0.000000e+00> : vector<2x8x8xf32>
    %58 = tpu.matmul %55, %56, %cst_21 {dimension_numbers = #tpu.dot_dimension_numbers<[2], [2], [1], [1], [0, 0, 0, 1, 1, 1], [0], [0]>} : vector<2x8x8xf32>, vector<2x8x8xf32>, vector<2x8x8xf32> -> vector<2x8x8xf32>
    "tpu.trace_stop"() : () -> ()
    %cst_22 = arith.constant dense<0xFF800000> : vector<2x8xf32>
    %59 = vector.multi_reduction <maximumf>, %58, %cst_22 [2] : vector<2x8x8xf32> to vector<2x8xf32>
    %60 = vector.shape_cast %59 : vector<2x8xf32> to vector<2x8x1xf32>
    %61 = vector.broadcast %60 : vector<2x8x1xf32> to vector<2x8x8xf32>
    %62 = arith.subf %58, %61 : vector<2x8x8xf32>
    %63 = math.exp %62 : vector<2x8x8xf32>
    %cst_23 = arith.constant dense<0.000000e+00> : vector<2x8xf32>
    %64 = vector.multi_reduction <add>, %63, %cst_23 [2] : vector<2x8x8xf32> to vector<2x8xf32>
    %65 = vector.shape_cast %64 : vector<2x8xf32> to vector<2x8x1xf32>
    %66 = vector.broadcast %65 : vector<2x8x1xf32> to vector<2x8x8xf32>
    %67 = arith.divf %63, %66 : vector<2x8x8xf32>
    "tpu.trace_start"() <{level = 10 : i32, message = "bti,bid->btd"}> : () -> ()
    %cst_24 = arith.constant dense<0.000000e+00> : vector<2x8x8xf32>
    %68 = tpu.matmul %67, %57, %cst_24 {dimension_numbers = #tpu.dot_dimension_numbers<[2], [1], [1], [2], [0, 0, 0, 1, 1, 2], [0], [0]>} : vector<2x8x8xf32>, vector<2x8x8xf32>, vector<2x8x8xf32> -> vector<2x8x8xf32>
    "tpu.trace_stop"() : () -> ()
    %69 = vector.extract_strided_slice %16 {offsets = [0, 0, 24], sizes = [2, 8, 8], strides = [1, 1, 1]} : vector<2x8x32xf32> to vector<2x8x8xf32>
    %cst_25 = arith.constant 0.353553385 : f32
    %70 = vector.broadcast %cst_25 : f32 to vector<2x8x8xf32>
    %71 = arith.mulf %69, %70 : vector<2x8x8xf32>
    %72 = vector.extract_strided_slice %18 {offsets = [0, 0, 24], sizes = [2, 8, 8], strides = [1, 1, 1]} : vector<2x8x32xf32> to vector<2x8x8xf32>
    %73 = vector.extract_strided_slice %20 {offsets = [0, 0, 24], sizes = [2, 8, 8], strides = [1, 1, 1]} : vector<2x8x32xf32> to vector<2x8x8xf32>
    "tpu.trace_start"() <{level = 10 : i32, message = "btd,bid->bti"}> : () -> ()
    %cst_26 = arith.constant dense<0.000000e+00> : vector<2x8x8xf32>
    %74 = tpu.matmul %71, %72, %cst_26 {dimension_numbers = #tpu.dot_dimension_numbers<[2], [2], [1], [1], [0, 0, 0, 1, 1, 1], [0], [0]>} : vector<2x8x8xf32>, vector<2x8x8xf32>, vector<2x8x8xf32> -> vector<2x8x8xf32>
    "tpu.trace_stop"() : () -> ()
    %cst_27 = arith.constant dense<0xFF800000> : vector<2x8xf32>
    %75 = vector.multi_reduction <maximumf>, %74, %cst_27 [2] : vector<2x8x8xf32> to vector<2x8xf32>
    %76 = vector.shape_cast %75 : vector<2x8xf32> to vector<2x8x1xf32>
    %77 = vector.broadcast %76 : vector<2x8x1xf32> to vector<2x8x8xf32>
    %78 = arith.subf %74, %77 : vector<2x8x8xf32>
    %79 = math.exp %78 : vector<2x8x8xf32>
    %cst_28 = arith.constant dense<0.000000e+00> : vector<2x8xf32>
    %80 = vector.multi_reduction <add>, %79, %cst_28 [2] : vector<2x8x8xf32> to vector<2x8xf32>
    %81 = vector.shape_cast %80 : vector<2x8xf32> to vector<2x8x1xf32>
    %82 = vector.broadcast %81 : vector<2x8x1xf32> to vector<2x8x8xf32>
    %83 = arith.divf %79, %82 : vector<2x8x8xf32>
    "tpu.trace_start"() <{level = 10 : i32, message = "bti,bid->btd"}> : () -> ()
    %cst_29 = arith.constant dense<0.000000e+00> : vector<2x8x8xf32>
    %84 = tpu.matmul %83, %73, %cst_29 {dimension_numbers = #tpu.dot_dimension_numbers<[2], [1], [1], [2], [0, 0, 0, 1, 1, 2], [0], [0]>} : vector<2x8x8xf32>, vector<2x8x8xf32>, vector<2x8x8xf32> -> vector<2x8x8xf32>
    "tpu.trace_stop"() : () -> ()
    %85 = tpu.concatenate %36, %52, %68, %84 in 2 : vector<2x8x8xf32>, vector<2x8x8xf32>, vector<2x8x8xf32>, vector<2x8x8xf32> -> vector<2x8x32xf32>
    %86 = vector.shape_cast %85 : vector<2x8x32xf32> to vector<16x32xf32>
    %87 = vector.extract_strided_slice %0 {offsets = [0, 96], sizes = [32, 32], strides = [1, 1]} : vector<32x128xf32> to vector<32x32xf32>
    %cst_30 = arith.constant dense<0.000000e+00> : vector<16x32xf32>
    %88 = tpu.matmul %86, %87, %cst_30 {dimension_numbers = #tpu.dot_dimension_numbers<[1], [0], [0], [1], [0, 0, 1, 1], [], []>} : vector<16x32xf32>, vector<32x32xf32>, vector<16x32xf32> -> vector<16x32xf32>
    %89 = vector.extract_strided_slice %1 {offsets = [0, 96], sizes = [1, 32], strides = [1, 1]} : vector<1x128xf32> to vector<1x32xf32>
    %90 = vector.broadcast %89 : vector<1x32xf32> to vector<16x32xf32>
    %91 = arith.addf %88, %90 : vector<16x32xf32>
    %c0_31 = arith.constant 0 : index
    %c0_32 = arith.constant 0 : index
    %92 = vector.load %arg5[%c0_31, %c0_32] : memref<16x32xf32, #tpu.memory_space<vmem>>, vector<16x32xf32>
    tpu.vector_store %arg5[%c0_31, %c0_32], %91 {strides = array<i32>} : memref<16x32xf32, #tpu.memory_space<vmem>>, vector<16x32xf32>,
    return
  }
  func.func @transform_0(%arg0: i32) -> (i32, i32, i32) {
    %c0_i32 = arith.constant 0 : i32
    %c0_i32_0 = arith.constant 0 : i32
    %c0_i32_1 = arith.constant 0 : i32
    %c0_i32_2 = arith.constant 0 : i32
    return %c0_i32, %c0_i32_0, %c0_i32_1 : i32, i32, i32
  }
  func.func @transform_1(%arg0: i32) -> (i32, i32, i32) {
    %c0_i32 = arith.constant 0 : i32
    %c0_i32_0 = arith.constant 0 : i32
    %c0_i32_1 = arith.constant 0 : i32
    %c0_i32_2 = arith.constant 0 : i32
    return %c0_i32, %c0_i32_0, %c0_i32_1 : i32, i32, i32
  }
  func.func @transform_2(%arg0: i32) -> (i32, i32) {
    %c0_i32 = arith.constant 0 : i32
    %c0_i32_0 = arith.constant 0 : i32
    %c0_i32_1 = arith.constant 0 : i32
    return %c0_i32, %c0_i32_0 : i32, i32
  }
  func.func @transform_3(%arg0: i32) -> (i32, i32) {
    %c0_i32 = arith.constant 0 : i32
    %c0_i32_0 = arith.constant 0 : i32
    %c0_i32_1 = arith.constant 0 : i32
    return %c0_i32, %c0_i32_0 : i32, i32
  }
  func.func @transform_4(%arg0: i32) -> (i32, i32) {
    %c0_i32 = arith.constant 0 : i32
    %c0_i32_0 = arith.constant 0 : i32
    %c0_i32_1 = arith.constant 0 : i32
    return %c0_i32, %c0_i32_0 : i32, i32
  }
}

</mosaic_0001>

<llo_original>
// kernel: tpu_custom_call.1
$region0: #{tpu_custom_call.1}
  #allocation0 [shape = 'u32[]', space=smem, size = 0x4, offset = 0x4, fixed_abs, tag = 'smem constant byte address 0x4 - core index']
  #allocation1 [shape = 'u32[144,128]{1,0:T(1,128)}', space=vmem, size = 0x12000, scoped, tag = 'internal scratch']
  %s0 = inlined_call_operand.hbm [shape: f32[2,8,32], index: 0, kind: input, shape index: {}]
  %s1 = inlined_call_operand.hbm [shape: f32[2,8,32], index: 1, kind: input, shape index: {}]
  %s2 = inlined_call_operand.hbm [shape: f32[32,128], index: 2, kind: input, shape index: {}]
  %s3 = inlined_call_operand.vmem [shape: f32[1,128], index: 3, kind: input, shape index: {}]
  %s4 = inlined_call_operand.hbm [shape: f32[16,32], index: 4, kind: output, shape index: {}]
  %s5 = sld [smem:[#allocation0]]
  $region38: #{tpu_custom_call.1} parent=0
    _
  %s7 = ssub.s32 1, %s5
  %s8 = scalar_select 0, %s7, %s5
  $region1: #{tpu_custom_call.1} parent=0
    #allocation2 [shape = 'u8[8192]{0}', space=vmem, size = 0x2000, scoped, tag = 'input window, operand 0, single buffered']
    #allocation3 [shape = 's32[1]{0}', space=sflag, size = 0x4, scoped, tag = 'scoped memory for tpu_custom_call.1']
    #allocation4 [shape = 's32[1]{0}', space=sflag, size = 0x4, scoped, tag = 'scoped memory for tpu_custom_call.1']
    #allocation5 [shape = 'u8[8192]{0}', space=vmem, size = 0x2000, scoped, tag = 'input window, operand 1, single buffered']
    #allocation6 [shape = 's32[1]{0}', space=sflag, size = 0x4, scoped, tag = 'scoped memory for tpu_custom_call.1']
    #allocation7 [shape = 'u8[16384]{0}', space=vmem, size = 0x4000, scoped, tag = 'input window, operand 2, single buffered']
    #allocation8 [shape = 'u8[8192]{0}', space=vmem, size = 0x2000, scoped, tag = 'output window, operand 0, single buffered']
    %9 = vsyncpa [#allocation3], 0
    %10 = vsyncpa [#allocation6], 0
    %11 = vsyncpa [#allocation4], 0
    // Predicated region
    $region2: #{tpu_custom_call.1} parent=1 // pred_check
      _
    $region3: #{tpu_custom_call.1} parent=1 // pred_check_branch
      %13 = sbr.rel (0) target = $region5
    $region4: #{tpu_custom_call.1} parent=1 // pred_region
      %s15 = ssub.s32 256, 256
      %16 = vsyncadd [#allocation3], %s15
      %s17 = sshll.u32 [#allocation2], 4
      %s18 = int_to_ptr.vmem [resolvable:$true] %s17
      %23 = dma.hbm_to_vmem [thread:$0]  %s0, 256, %s18, [#allocation3], 128, 128, 8
    $region5: #{tpu_custom_call.1} parent=1 // pred_fallthru
      _
    // Predicated region
    $region6: #{tpu_custom_call.1} parent=1 // pred_check
      _
    $region7: #{tpu_custom_call.1} parent=1 // pred_check_branch
      %25 = sbr.rel (0) target = $region9
    $region8: #{tpu_custom_call.1} parent=1 // pred_region
      %s27 = ssub.s32 256, 256
      %28 = vsyncadd [#allocation6], %s27
      %s29 = sshll.u32 [#allocation5], 4
      %s30 = int_to_ptr.vmem [resolvable:$true] %s29
      %35 = dma.hbm_to_vmem [thread:$0]  %s1, 256, %s30, [#allocation6], 128, 128, 8
    $region9: #{tpu_custom_call.1} parent=1 // pred_fallthru
      _
    // Predicated region
    $region10: #{tpu_custom_call.1} parent=1 // pred_check
      _
    $region11: #{tpu_custom_call.1} parent=1 // pred_check_branch
      %37 = sbr.rel (0) target = $region13
    $region12: #{tpu_custom_call.1} parent=1 // pred_region
      %s39 = ssub.s32 512, 512
      %40 = vsyncadd [#allocation6], %s39
      %s41 = sshll.u32 [#allocation7], 4
      %s42 = int_to_ptr.vmem [resolvable:$true] %s41
      %47 = dma.hbm_to_vmem [thread:$0]  %s2, 512, %s42, [#allocation6], 128, 128, 8
    $region13: #{tpu_custom_call.1} parent=1 // pred_fallthru
      _
    // Predicated region
    $region14: #{tpu_custom_call.1} parent=1 // pred_check
      _
    $region15: #{tpu_custom_call.1} parent=1 // pred_check_branch
      %49 = sbr.rel (0) target = $region17
    $region16: #{tpu_custom_call.1} parent=1 // pred_region
      _
    $region17: #{tpu_custom_call.1} parent=1 // pred_fallthru
      _
    // Predicated region
    $region18: #{tpu_custom_call.1} parent=1 // pred_check
      _
    $region19: #{tpu_custom_call.1} parent=1 // pred_check_branch
      %51 = sbr.rel (0) target = $region21
    $region20: #{tpu_custom_call.1} parent=1 // pred_region
      %52 = dma.done [#allocation3], 256
    $region21: #{tpu_custom_call.1} parent=1 // pred_fallthru
      _
    // Predicated region
    $region22: #{tpu_custom_call.1} parent=1 // pred_check
      _
    $region23: #{tpu_custom_call.1} parent=1 // pred_check_branch
      %54 = sbr.rel (0) target = $region25
    $region24: #{tpu_custom_call.1} parent=1 // pred_region
      %55 = dma.done [#allocation6], 256
    $region25: #{tpu_custom_call.1} parent=1 // pred_fallthru
      _
    // Predicated region
    $region26: #{tpu_custom_call.1} parent=1 // pred_check
      _
    $region27: #{tpu_custom_call.1} parent=1 // pred_check_branch
      %57 = sbr.rel (0) target = $region29
    $region28: #{tpu_custom_call.1} parent=1 // pred_region
      %58 = dma.done [#allocation6], 512
    $region29: #{tpu_custom_call.1} parent=1 // pred_fallthru
      _
    %v59 = vld [vmem:[#allocation7] sm:$0xff]
    %v60 = vld [vmem:[#allocation7 + $0x8] sm:$0xff]
    %v61 = vld [vmem:[#allocation7 + $0x10] sm:$0xff]
    %v62 = vld [vmem:[#allocation7 + $0x18] sm:$0xff]
    %v63 = vld [vmem:[%s3] sm:$0x1]
    %v64 = vld [vmem:[#allocation2] sm:$0xff]
    %v65 = vld [vmem:[#allocation2 + $0x8] sm:$0xff]
    %v66 = vld [vmem:[#allocation5] sm:$0xff]
    %v67 = vld [vmem:[#allocation5 + $0x8] sm:$0xff]
    %v69 = vlaneseq
    %v70 = vshrl.u32 %v69, 7
    %v71 = vsub.s32 0, %v70
    %v72 = vrot.slane %v63, %v71
    %vm74 = vcmask 261120
    %v76 = vsel %vm74, %v64, 0
    %v79 = vsel %vm74, %v65, 0
    %81 = vmatprep.subr.mxu0 0.0
    %82 = vmatpush1.msra.mxu0 0.0
    %83 = vmatprep.subr.mxu0 0.0
    %84 = vmatpush1.msra.mxu0 0.0
    %85 = vmatprep.subr.mxu0 0.0
    %86 = vmatpush1.msra.mxu0 0.0
    %87 = vmatprep.subr.mxu0 0.0
    %88 = vmatpush1.msra.mxu0 0.0
    %89 = vmatprep.subr.mxu0 0.0
    %90 = vmatpush1.msra.mxu0 0.0
    %91 = vmatprep.subr.mxu0 0.0
    %92 = vmatpush1.msra.mxu0 0.0
    %93 = vmatprep.subr.mxu0 0.0
    %94 = vmatpush1.msra.mxu0 0.0
    %95 = vmatprep.subr.mxu0 0.0
    %96 = vmatpush1.msra.mxu0 0.0
    %97 = vmatprep.subr.mxu0 0.0
    %98 = vmatpush1.msra.mxu0 0.0
    %99 = vmatprep.subr.mxu0 0.0
    %100 = vmatpush1.msra.mxu0 0.0
    %101 = vmatprep.subr.mxu0 0.0
    %102 = vmatpush1.msra.mxu0 0.0
    %103 = vmatprep.subr.mxu0 0.0
    %104 = vmatpush1.msra.mxu0 0.0
    %105 = vmatprep.subr.mxu0 0.0
    %106 = vmatpush1.msra.mxu0 %v62
    %107 = vmatprep.subr.mxu0 0.0
    %108 = vmatpush1.msra.mxu0 %v61
    %109 = vmatprep.subr.mxu0 0.0
    %110 = vmatpush1.msra.mxu0 %v60
    %111 = vmatprep.subr.mxu0 0.0
    %112 = vmatpush1.msra.mxu0 %v59
    %113 = vmatprep.subr.mxu0 0.0
    %114 = vmatpush2.msra.mxu0 0.0
    %115 = vmatprep.subr.mxu0 0.0
    %116 = vmatpush2.msra.mxu0 0.0
    %117 = vmatprep.subr.mxu0 0.0
    %118 = vmatpush2.msra.mxu0 0.0
    %119 = vmatprep.subr.mxu0 0.0
    %120 = vmatpush2.msra.mxu0 0.0
    %121 = vmatprep.subr.mxu0 0.0
    %122 = vmatpush2.msra.mxu0 0.0
    %123 = vmatprep.subr.mxu0 0.0
    %124 = vmatpush2.msra.mxu0 0.0
    %125 = vmatprep.subr.mxu0 0.0
    %126 = vmatpush2.msra.mxu0 0.0
    %127 = vmatprep.subr.mxu0 0.0
    %128 = vmatpush2.msra.mxu0 0.0
    %129 = vmatprep.subr.mxu0 0.0
    %130 = vmatpush2.msra.mxu0 0.0
    %131 = vmatprep.subr.mxu0 0.0
    %132 = vmatpush2.msra.mxu0 0.0
    %133 = vmatprep.subr.mxu0 0.0
    %134 = vmatpush2.msra.mxu0 0.0
    %135 = vmatprep.subr.mxu0 0.0
    %136 = vmatpush2.msra.mxu0 0.0
    %137 = vmatprep.subr.mxu0 0.0
    %138 = vmatpush2.msra.mxu0 0.0
    %139 = vmatprep.subr.mxu0 0.0
    %140 = vmatpush2.msra.mxu0 0.0
    %141 = vmatprep.subr.mxu0 0.0
    %142 = vmatpush2.msra.mxu0 0.0
    %143 = vmatprep.subr.mxu0 0.0
    %144 = vmatpush2.msra.mxu0 0.0
    %145 = vmatprep.mubr.f32.mxu0 0.0
    %146 = vmatmul.mubr.f32.gmra.mxu0 %v76
    %v147 = vpop.f32.mrf.mxu0
    %v148 = vadd.f32 %v72, %v147
    %v149 = vpop.f32.mrf.mxu0
    %150 = vmatprep.mubr.f32.mxu0 0.0
    %151 = vmatmul.mubr.f32.gmra.mxu0 %v79
    %v152 = vpop.f32.mrf.mxu0
    %v153 = vadd.f32 %v72, %v152
    %v154 = vpop.f32.mrf.mxu0
    %155 = vdwg.mxu0
    %160 = vrot.lane.b32.xlu0 %v59, 96
    %v161 = vpop.permute.xlu0 %160
    %162 = vrot.lane.b32.xlu0 %v60, 96
    %v163 = vpop.permute.xlu0 %162
    %164 = vrot.lane.b32.xlu0 %v61, 96
    %v165 = vpop.permute.xlu0 %164
    %166 = vrot.lane.b32.xlu0 %v62, 96
    %v167 = vpop.permute.xlu0 %166
    %172 = vrot.lane.b32.xlu0 %v72, 96
    %v173 = vpop.permute.xlu0 %172
    %v176 = vsel %vm74, %v66, 0
    %v179 = vsel %vm74, %v67, 0
    %181 = vmatprep.subr.mxu0 0.0
    %182 = vmatpush1.msra.mxu0 0.0
    %183 = vmatprep.subr.mxu0 0.0
    %184 = vmatpush1.msra.mxu0 0.0
    %185 = vmatprep.subr.mxu0 0.0
    %186 = vmatpush1.msra.mxu0 0.0
    %187 = vmatprep.subr.mxu0 0.0
    %188 = vmatpush1.msra.mxu0 0.0
    %189 = vmatprep.subr.mxu0 0.0
    %190 = vmatpush1.msra.mxu0 0.0
    %191 = vmatprep.subr.mxu0 0.0
    %192 = vmatpush1.msra.mxu0 0.0
    %193 = vmatprep.subr.mxu0 0.0
    %194 = vmatpush1.msra.mxu0 0.0
    %195 = vmatprep.subr.mxu0 0.0
    %196 = vmatpush1.msra.mxu0 0.0
    %197 = vmatprep.subr.mxu0 0.0
    %198 = vmatpush1.msra.mxu0 0.0
    %199 = vmatprep.subr.mxu0 0.0
    %200 = vmatpush1.msra.mxu0 0.0
    %201 = vmatprep.subr.mxu0 0.0
    %202 = vmatpush1.msra.mxu0 0.0
    %203 = vmatprep.subr.mxu0 0.0
    %204 = vmatpush1.msra.mxu0 0.0
    %205 = vmatprep.subr.mxu0 0.0
    %206 = vmatpush1.msra.mxu0 %v167
    %207 = vmatprep.subr.mxu0 0.0
    %208 = vmatpush1.msra.mxu0 %v165
    %209 = vmatprep.subr.mxu0 0.0
    %210 = vmatpush1.msra.mxu0 %v163
    %211 = vmatprep.subr.mxu0 0.0
    %212 = vmatpush1.msra.mxu0 %v161
    %213 = vmatprep.subr.mxu0 0.0
    %214 = vmatpush2.msra.mxu0 0.0
    %215 = vmatprep.subr.mxu0 0.0
    %216 = vmatpush2.msra.mxu0 0.0
    %217 = vmatprep.subr.mxu0 0.0
    %218 = vmatpush2.msra.mxu0 0.0
    %219 = vmatprep.subr.mxu0 0.0
    %220 = vmatpush2.msra.mxu0 0.0
    %221 = vmatprep.subr.mxu0 0.0
    %222 = vmatpush2.msra.mxu0 0.0
    %223 = vmatprep.subr.mxu0 0.0
    %224 = vmatpush2.msra.mxu0 0.0
    %225 = vmatprep.subr.mxu0 0.0
    %226 = vmatpush2.msra.mxu0 0.0
    %227 = vmatprep.subr.mxu0 0.0
    %228 = vmatpush2.msra.mxu0 0.0
    %229 = vmatprep.subr.mxu0 0.0
    %230 = vmatpush2.msra.mxu0 0.0
    %231 = vmatprep.subr.mxu0 0.0
    %232 = vmatpush2.msra.mxu0 0.0
    %233 = vmatprep.subr.mxu0 0.0
    %234 = vmatpush2.msra.mxu0 0.0
    %235 = vmatprep.subr.mxu0 0.0
    %236 = vmatpush2.msra.mxu0 0.0
    %237 = vmatprep.subr.mxu0 0.0
    %238 = vmatpush2.msra.mxu0 0.0
    %239 = vmatprep.subr.mxu0 0.0
    %240 = vmatpush2.msra.mxu0 0.0
    %241 = vmatprep.subr.mxu0 0.0
    %242 = vmatpush2.msra.mxu0 0.0
    %243 = vmatprep.subr.mxu0 0.0
    %244 = vmatpush2.msra.mxu0 0.0
    %245 = vmatprep.mubr.f32.mxu0 0.0
    %246 = vmatmul.mubr.f32.gmra.mxu0 %v176
    %v247 = vpop.f32.mrf.mxu0
    %v248 = vadd.f32 %v173, %v247
    %v249 = vpop.f32.mrf.mxu0
    %250 = vmatprep.mubr.f32.mxu0 0.0
    %251 = vmatmul.mubr.f32.gmra.mxu0 %v179
    %v252 = vpop.f32.mrf.mxu0
    %v253 = vadd.f32 %v173, %v252
    %v254 = vpop.f32.mrf.mxu0
    %255 = vdwg.mxu0
    %v256 = vmul.f32 %v148, 0.35355338
    %v257 = vmul.f32 %v153, 0.35355338
    %vm258 = vcmask 64512
    %v260 = vsel %vm258, %v256, 0
    %v263 = vsel %vm258, %v248, 0
    %265 = vmatprep.subr.mxu0 0.0
    %266 = vmatpush1.xpose.msra.mxu0 0.0
    %267 = vmatprep.subr.mxu0 0.0
    %268 = vmatpush1.xpose.msra.mxu0 0.0
    %269 = vmatprep.subr.mxu0 0.0
    %270 = vmatpush1.xpose.msra.mxu0 0.0
    %271 = vmatprep.subr.mxu0 0.0
    %272 = vmatpush1.xpose.msra.mxu0 0.0
    %273 = vmatprep.subr.mxu0 0.0
    %274 = vmatpush1.xpose.msra.mxu0 0.0
    %275 = vmatprep.subr.mxu0 0.0
    %276 = vmatpush1.xpose.msra.mxu0 0.0
    %277 = vmatprep.subr.mxu0 0.0
    %278 = vmatpush1.xpose.msra.mxu0 0.0
    %279 = vmatprep.subr.mxu0 0.0
    %280 = vmatpush1.xpose.msra.mxu0 0.0
    %281 = vmatprep.subr.mxu0 0.0
    %282 = vmatpush1.xpose.msra.mxu0 0.0
    %283 = vmatprep.subr.mxu0 0.0
    %284 = vmatpush1.xpose.msra.mxu0 0.0
    %285 = vmatprep.subr.mxu0 0.0
    %286 = vmatpush1.xpose.msra.mxu0 0.0
    %287 = vmatprep.subr.mxu0 0.0
    %288 = vmatpush1.xpose.msra.mxu0 0.0
    %289 = vmatprep.subr.mxu0 0.0
    %290 = vmatpush1.xpose.msra.mxu0 0.0
    %291 = vmatprep.subr.mxu0 0.0
    %292 = vmatpush1.xpose.msra.mxu0 0.0
    %293 = vmatprep.subr.mxu0 0.0
    %294 = vmatpush1.xpose.msra.mxu0 0.0
    %295 = vmatprep.subr.mxu0 0.0
    %296 = vmatpush1.xpose.msra.mxu0 %v263
    %297 = vmatprep.subr.mxu0 0.0
    %298 = vmatpush2.xpose.msra.mxu0 0.0
    %299 = vmatprep.subr.mxu0 0.0
    %300 = vmatpush2.xpose.msra.mxu0 0.0
    %301 = vmatprep.subr.mxu0 0.0
    %302 = vmatpush2.xpose.msra.mxu0 0.0
    %303 = vmatprep.subr.mxu0 0.0
    %304 = vmatpush2.xpose.msra.mxu0 0.0
    %305 = vmatprep.subr.mxu0 0.0
    %306 = vmatpush2.xpose.msra.mxu0 0.0
    %307 = vmatprep.subr.mxu0 0.0
    %308 = vmatpush2.xpose.msra.mxu0 0.0
    %309 = vmatprep.subr.mxu0 0.0
    %310 = vmatpush2.xpose.msra.mxu0 0.0
    %311 = vmatprep.subr.mxu0 0.0
    %312 = vmatpush2.xpose.msra.mxu0 0.0
    %313 = vmatprep.subr.mxu0 0.0
    %314 = vmatpush2.xpose.msra.mxu0 0.0
    %315 = vmatprep.subr.mxu0 0.0
    %316 = vmatpush2.xpose.msra.mxu0 0.0
    %317 = vmatprep.subr.mxu0 0.0
    %318 = vmatpush2.xpose.msra.mxu0 0.0
    %319 = vmatprep.subr.mxu0 0.0
    %320 = vmatpush2.xpose.msra.mxu0 0.0
    %321 = vmatprep.subr.mxu0 0.0
    %322 = vmatpush2.xpose.msra.mxu0 0.0
    %323 = vmatprep.subr.mxu0 0.0
    %324 = vmatpush2.xpose.msra.mxu0 0.0
    %325 = vmatprep.subr.mxu0 0.0
    %326 = vmatpush2.xpose.msra.mxu0 0.0
    %327 = vmatprep.subr.mxu0 0.0
    %328 = vmatpush2.xpose.msra.mxu0 0.0
    %329 = vmatprep.mubr.f32.mxu0 0.0
    %330 = vmatmul.mubr.f32.gmra.mxu0 %v260
    %v331 = vpop.f32.mrf.mxu0
    %v332 = vadd.f32 0.0, %v331
    %v333 = vpop.f32.mrf.mxu0
    %334 = vdwg.mxu0
    %v336 = vsel %vm258, %v257, 0
    %v339 = vsel %vm258, %v253, 0
    %341 = vmatprep.subr.mxu0 0.0
    %342 = vmatpush1.xpose.msra.mxu0 0.0
    %343 = vmatprep.subr.mxu0 0.0
    %344 = vmatpush1.xpose.msra.mxu0 0.0
    %345 = vmatprep.subr.mxu0 0.0
    %346 = vmatpush1.xpose.msra.mxu0 0.0
    %347 = vmatprep.subr.mxu0 0.0
    %348 = vmatpush1.xpose.msra.mxu0 0.0
    %349 = vmatprep.subr.mxu0 0.0
    %350 = vmatpush1.xpose.msra.mxu0 0.0
    %351 = vmatprep.subr.mxu0 0.0
    %352 = vmatpush1.xpose.msra.mxu0 0.0
    %353 = vmatprep.subr.mxu0 0.0
    %354 = vmatpush1.xpose.msra.mxu0 0.0
    %355 = vmatprep.subr.mxu0 0.0
    %356 = vmatpush1.xpose.msra.mxu0 0.0
    %357 = vmatprep.subr.mxu0 0.0
    %358 = vmatpush1.xpose.msra.mxu0 0.0
    %359 = vmatprep.subr.mxu0 0.0
    %360 = vmatpush1.xpose.msra.mxu0 0.0
    %361 = vmatprep.subr.mxu0 0.0
    %362 = vmatpush1.xpose.msra.mxu0 0.0
    %363 = vmatprep.subr.mxu0 0.0
    %364 = vmatpush1.xpose.msra.mxu0 0.0
    %365 = vmatprep.subr.mxu0 0.0
    %366 = vmatpush1.xpose.msra.mxu0 0.0
    %367 = vmatprep.subr.mxu0 0.0
    %368 = vmatpush1.xpose.msra.mxu0 0.0
    %369 = vmatprep.subr.mxu0 0.0
    %370 = vmatpush1.xpose.msra.mxu0 0.0
    %371 = vmatprep.subr.mxu0 0.0
    %372 = vmatpush1.xpose.msra.mxu0 %v339
    %373 = vmatprep.subr.mxu0 0.0
    %374 = vmatpush2.xpose.msra.mxu0 0.0
    %375 = vmatprep.subr.mxu0 0.0
    %376 = vmatpush2.xpose.msra.mxu0 0.0
    %377 = vmatprep.subr.mxu0 0.0
    %378 = vmatpush2.xpose.msra.mxu0 0.0
    %379 = vmatprep.subr.mxu0 0.0
    %380 = vmatpush2.xpose.msra.mxu0 0.0
    %381 = vmatprep.subr.mxu0 0.0
    %382 = vmatpush2.xpose.msra.mxu0 0.0
    %383 = vmatprep.subr.mxu0 0.0
    %384 = vmatpush2.xpose.msra.mxu0 0.0
    %385 = vmatprep.subr.mxu0 0.0
    %386 = vmatpush2.xpose.msra.mxu0 0.0
    %387 = vmatprep.subr.mxu0 0.0
    %388 = vmatpush2.xpose.msra.mxu0 0.0
    %389 = vmatprep.subr.mxu0 0.0
    %390 = vmatpush2.xpose.msra.mxu0 0.0
    %391 = vmatprep.subr.mxu0 0.0
    %392 = vmatpush2.xpose.msra.mxu0 0.0
    %393 = vmatprep.subr.mxu0 0.0
    %394 = vmatpush2.xpose.msra.mxu0 0.0
    %395 = vmatprep.subr.mxu0 0.0
    %396 = vmatpush2.xpose.msra.mxu0 0.0
    %397 = vmatprep.subr.mxu0 0.0
    %398 = vmatpush2.xpose.msra.mxu0 0.0
    %399 = vmatprep.subr.mxu0 0.0
    %400 = vmatpush2.xpose.msra.mxu0 0.0
    %401 = vmatprep.subr.mxu0 0.0
    %402 = vmatpush2.xpose.msra.mxu0 0.0
    %403 = vmatprep.subr.mxu0 0.0
    %404 = vmatpush2.xpose.msra.mxu0 0.0
    %405 = vmatprep.mubr.f32.mxu0 0.0
    %406 = vmatmul.mubr.f32.gmra.mxu0 %v336
    %v407 = vpop.f32.mrf.mxu0
    %v408 = vadd.f32 0.0, %v407
    %v409 = vpop.f32.mrf.mxu0
    %410 = vdwg.mxu0
    %v411 = vsel %vm258, %v332, -inf
    %412 = vmax.xlane.f32.xlu0 %v411
    %v413 = vpop.xlane.xlu0 %412
    %v414 = vsel %vm258, %v408, -inf
    %415 = vmax.xlane.f32.xlu0 %v414
    %v416 = vpop.xlane.xlu0 %415
    %v417 = vsub.f32 %v332, %v413
    %v418 = vsub.f32 %v408, %v416
    %v419 = vmul.f32 %v417, 1.442695
    %v420 = vpow.pop %v419
    %v421 = vmul.f32 %v418, 1.442695
    %v422 = vpow.pop %v421
    %v423 = vsel %vm258, %v420, 0.0
    %424 = vadd.xlane.f32.xlu0 %v423
    %v425 = vpop.xlane.xlu0 %424
    %v426 = vsel %vm258, %v422, 0.0
    %427 = vadd.xlane.f32.xlu0 %v426
    %v428 = vpop.xlane.xlu0 %427
    %v429 = vrcp.pop %v425
    %v430 = vmul.f32 %v420, %v429
    %v431 = vrcp.pop %v428
    %v432 = vmul.f32 %v422, %v431
    %433 = vrot.lane.b32.xlu0 %v248, 96
    %v434 = vpop.permute.xlu0 %433
    %v437 = vsel %vm258, %v430, 0
    %439 = vmatprep.subr.mxu0 0.0
    %440 = vmatpush1.msra.mxu0 0.0
    %441 = vmatprep.subr.mxu0 0.0
    %442 = vmatpush1.msra.mxu0 0.0
    %443 = vmatprep.subr.mxu0 0.0
    %444 = vmatpush1.msra.mxu0 0.0
    %445 = vmatprep.subr.mxu0 0.0
    %446 = vmatpush1.msra.mxu0 0.0
    %447 = vmatprep.subr.mxu0 0.0
    %448 = vmatpush1.msra.mxu0 0.0
    %449 = vmatprep.subr.mxu0 0.0
    %450 = vmatpush1.msra.mxu0 0.0
    %451 = vmatprep.subr.mxu0 0.0
    %452 = vmatpush1.msra.mxu0 0.0
    %453 = vmatprep.subr.mxu0 0.0
    %454 = vmatpush1.msra.mxu0 0.0
    %455 = vmatprep.subr.mxu0 0.0
    %456 = vmatpush1.msra.mxu0 0.0
    %457 = vmatprep.subr.mxu0 0.0
    %458 = vmatpush1.msra.mxu0 0.0
    %459 = vmatprep.subr.mxu0 0.0
    %460 = vmatpush1.msra.mxu0 0.0
    %461 = vmatprep.subr.mxu0 0.0
    %462 = vmatpush1.msra.mxu0 0.0
    %463 = vmatprep.subr.mxu0 0.0
    %464 = vmatpush1.msra.mxu0 0.0
    %465 = vmatprep.subr.mxu0 0.0
    %466 = vmatpush1.msra.mxu0 0.0
    %467 = vmatprep.subr.mxu0 0.0
    %468 = vmatpush1.msra.mxu0 0.0
    %469 = vmatprep.subr.mxu0 0.0
    %470 = vmatpush1.msra.mxu0 %v434
    %471 = vmatprep.subr.mxu0 0.0
    %472 = vmatpush2.msra.mxu0 0.0
    %473 = vmatprep.subr.mxu0 0.0
    %474 = vmatpush2.msra.mxu0 0.0
    %475 = vmatprep.subr.mxu0 0.0
    %476 = vmatpush2.msra.mxu0 0.0
    %477 = vmatprep.subr.mxu0 0.0
    %478 = vmatpush2.msra.mxu0 0.0
    %479 = vmatprep.subr.mxu0 0.0
    %480 = vmatpush2.msra.mxu0 0.0
    %481 = vmatprep.subr.mxu0 0.0
    %482 = vmatpush2.msra.mxu0 0.0
    %483 = vmatprep.subr.mxu0 0.0
    %484 = vmatpush2.msra.mxu0 0.0
    %485 = vmatprep.subr.mxu0 0.0
    %486 = vmatpush2.msra.mxu0 0.0
    %487 = vmatprep.subr.mxu0 0.0
    %488 = vmatpush2.msra.mxu0 0.0
    %489 = vmatprep.subr.mxu0 0.0
    %490 = vmatpush2.msra.mxu0 0.0
    %491 = vmatprep.subr.mxu0 0.0
    %492 = vmatpush2.msra.mxu0 0.0
    %493 = vmatprep.subr.mxu0 0.0
    %494 = vmatpush2.msra.mxu0 0.0
    %495 = vmatprep.subr.mxu0 0.0
    %496 = vmatpush2.msra.mxu0 0.0
    %497 = vmatprep.subr.mxu0 0.0
    %498 = vmatpush2.msra.mxu0 0.0
    %499 = vmatprep.subr.mxu0 0.0
    %500 = vmatpush2.msra.mxu0 0.0
    %501 = vmatprep.subr.mxu0 0.0
    %502 = vmatpush2.msra.mxu0 0.0
    %503 = vmatprep.mubr.f32.mxu0 0.0
    %504 = vmatmul.mubr.f32.gmra.mxu0 %v437
    %v505 = vpop.f32.mrf.mxu0
    %v506 = vadd.f32 0.0, %v505
    %v507 = vpop.f32.mrf.mxu0
    %508 = vdwg.mxu0
    %509 = vrot.lane.b32.xlu0 %v253, 96
    %v510 = vpop.permute.xlu0 %509
    %v513 = vsel %vm258, %v432, 0
    %515 = vmatprep.subr.mxu0 0.0
    %516 = vmatpush1.msra.mxu0 0.0
    %517 = vmatprep.subr.mxu0 0.0
    %518 = vmatpush1.msra.mxu0 0.0
    %519 = vmatprep.subr.mxu0 0.0
    %520 = vmatpush1.msra.mxu0 0.0
    %521 = vmatprep.subr.mxu0 0.0
    %522 = vmatpush1.msra.mxu0 0.0
    %523 = vmatprep.subr.mxu0 0.0
    %524 = vmatpush1.msra.mxu0 0.0
    %525 = vmatprep.subr.mxu0 0.0
    %526 = vmatpush1.msra.mxu0 0.0
    %527 = vmatprep.subr.mxu0 0.0
    %528 = vmatpush1.msra.mxu0 0.0
    %529 = vmatprep.subr.mxu0 0.0
    %530 = vmatpush1.msra.mxu0 0.0
    %531 = vmatprep.subr.mxu0 0.0
    %532 = vmatpush1.msra.mxu0 0.0
    %533 = vmatprep.subr.mxu0 0.0
    %534 = vmatpush1.msra.mxu0 0.0
    %535 = vmatprep.subr.mxu0 0.0
    %536 = vmatpush1.msra.mxu0 0.0
    %537 = vmatprep.subr.mxu0 0.0
    %538 = vmatpush1.msra.mxu0 0.0
    %539 = vmatprep.subr.mxu0 0.0
    %540 = vmatpush1.msra.mxu0 0.0
    %541 = vmatprep.subr.mxu0 0.0
    %542 = vmatpush1.msra.mxu0 0.0
    %543 = vmatprep.subr.mxu0 0.0
    %544 = vmatpush1.msra.mxu0 0.0
    %545 = vmatprep.subr.mxu0 0.0
    %546 = vmatpush1.msra.mxu0 %v510
    %547 = vmatprep.subr.mxu0 0.0
    %548 = vmatpush2.msra.mxu0 0.0
    %549 = vmatprep.subr.mxu0 0.0
    %550 = vmatpush2.msra.mxu0 0.0
    %551 = vmatprep.subr.mxu0 0.0
    %552 = vmatpush2.msra.mxu0 0.0
    %553 = vmatprep.subr.mxu0 0.0
    %554 = vmatpush2.msra.mxu0 0.0
    %555 = vmatprep.subr.mxu0 0.0
    %556 = vmatpush2.msra.mxu0 0.0
    %557 = vmatprep.subr.mxu0 0.0
    %558 = vmatpush2.msra.mxu0 0.0
    %559 = vmatprep.subr.mxu0 0.0
    %560 = vmatpush2.msra.mxu0 0.0
    %561 = vmatprep.subr.mxu0 0.0
    %562 = vmatpush2.msra.mxu0 0.0
    %563 = vmatprep.subr.mxu0 0.0
    %564 = vmatpush2.msra.mxu0 0.0
    %565 = vmatprep.subr.mxu0 0.0
    %566 = vmatpush2.msra.mxu0 0.0
    %567 = vmatprep.subr.mxu0 0.0
    %568 = vmatpush2.msra.mxu0 0.0
    %569 = vmatprep.subr.mxu0 0.0
    %570 = vmatpush2.msra.mxu0 0.0
    %571 = vmatprep.subr.mxu0 0.0
    %572 = vmatpush2.msra.mxu0 0.0
    %573 = vmatprep.subr.mxu0 0.0
    %574 = vmatpush2.msra.mxu0 0.0
    %575 = vmatprep.subr.mxu0 0.0
    %576 = vmatpush2.msra.mxu0 0.0
    %577 = vmatprep.subr.mxu0 0.0
    %578 = vmatpush2.msra.mxu0 0.0
    %579 = vmatprep.mubr.f32.mxu0 0.0
    %580 = vmatmul.mubr.f32.gmra.mxu0 %v513
    %v581 = vpop.f32.mrf.mxu0
    %v582 = vadd.f32 0.0, %v581
    %v583 = vpop.f32.mrf.mxu0
    %584 = vdwg.mxu0
    %585 = vrot.lane.b32.xlu0 %v256, 120
    %v586 = vpop.permute.xlu0 %585
    %587 = vrot.lane.b32.xlu0 %v248, 120
    %v588 = vpop.permute.xlu0 %587
    %v589 = vsel %vm258, %v586, 0
    %v591 = vsel %vm258, %v588, 0
    %593 = vmatprep.subr.mxu0 0.0
    %594 = vmatpush1.xpose.msra.mxu0 0.0
    %595 = vmatprep.subr.mxu0 0.0
    %596 = vmatpush1.xpose.msra.mxu0 0.0
    %597 = vmatprep.subr.mxu0 0.0
    %598 = vmatpush1.xpose.msra.mxu0 0.0
    %599 = vmatprep.subr.mxu0 0.0
    %600 = vmatpush1.xpose.msra.mxu0 0.0
    %601 = vmatprep.subr.mxu0 0.0
    %602 = vmatpush1.xpose.msra.mxu0 0.0
    %603 = vmatprep.subr.mxu0 0.0
    %604 = vmatpush1.xpose.msra.mxu0 0.0
    %605 = vmatprep.subr.mxu0 0.0
    %606 = vmatpush1.xpose.msra.mxu0 0.0
    %607 = vmatprep.subr.mxu0 0.0
    %608 = vmatpush1.xpose.msra.mxu0 0.0
    %609 = vmatprep.subr.mxu0 0.0
    %610 = vmatpush1.xpose.msra.mxu0 0.0
    %611 = vmatprep.subr.mxu0 0.0
    %612 = vmatpush1.xpose.msra.mxu0 0.0
    %613 = vmatprep.subr.mxu0 0.0
    %614 = vmatpush1.xpose.msra.mxu0 0.0
    %615 = vmatprep.subr.mxu0 0.0
    %616 = vmatpush1.xpose.msra.mxu0 0.0
    %617 = vmatprep.subr.mxu0 0.0
    %618 = vmatpush1.xpose.msra.mxu0 0.0
    %619 = vmatprep.subr.mxu0 0.0
    %620 = vmatpush1.xpose.msra.mxu0 0.0
    %621 = vmatprep.subr.mxu0 0.0
    %622 = vmatpush1.xpose.msra.mxu0 0.0
    %623 = vmatprep.subr.mxu0 0.0
    %624 = vmatpush1.xpose.msra.mxu0 %v591
    %625 = vmatprep.subr.mxu0 0.0
    %626 = vmatpush2.xpose.msra.mxu0 0.0
    %627 = vmatprep.subr.mxu0 0.0
    %628 = vmatpush2.xpose.msra.mxu0 0.0
    %629 = vmatprep.subr.mxu0 0.0
    %630 = vmatpush2.xpose.msra.mxu0 0.0
    %631 = vmatprep.subr.mxu0 0.0
    %632 = vmatpush2.xpose.msra.mxu0 0.0
    %633 = vmatprep.subr.mxu0 0.0
    %634 = vmatpush2.xpose.msra.mxu0 0.0
    %635 = vmatprep.subr.mxu0 0.0
    %636 = vmatpush2.xpose.msra.mxu0 0.0
    %637 = vmatprep.subr.mxu0 0.0
    %638 = vmatpush2.xpose.msra.mxu0 0.0
    %639 = vmatprep.subr.mxu0 0.0
    %640 = vmatpush2.xpose.msra.mxu0 0.0
    %641 = vmatprep.subr.mxu0 0.0
    %642 = vmatpush2.xpose.msra.mxu0 0.0
    %643 = vmatprep.subr.mxu0 0.0
    %644 = vmatpush2.xpose.msra.mxu0 0.0
    %645 = vmatprep.subr.mxu0 0.0
    %646 = vmatpush2.xpose.msra.mxu0 0.0
    %647 = vmatprep.subr.mxu0 0.0
    %648 = vmatpush2.xpose.msra.mxu0 0.0
    %649 = vmatprep.subr.mxu0 0.0
    %650 = vmatpush2.xpose.msra.mxu0 0.0
    %651 = vmatprep.subr.mxu0 0.0
    %652 = vmatpush2.xpose.msra.mxu0 0.0
    %653 = vmatprep.subr.mxu0 0.0
    %654 = vmatpush2.xpose.msra.mxu0 0.0
    %655 = vmatprep.subr.mxu0 0.0
    %656 = vmatpush2.xpose.msra.mxu0 0.0
    %657 = vmatprep.mubr.f32.mxu0 0.0
    %658 = vmatmul.mubr.f32.gmra.mxu0 %v589
    %v659 = vpop.f32.mrf.mxu0
    %v660 = vadd.f32 0.0, %v659
    %v661 = vpop.f32.mrf.mxu0
    %662 = vdwg.mxu0
    %663 = vrot.lane.b32.xlu0 %v257, 120
    %v664 = vpop.permute.xlu0 %663
    %665 = vrot.lane.b32.xlu0 %v253, 120
    %v666 = vpop.permute.xlu0 %665
    %v667 = vsel %vm258, %v664, 0
    %v669 = vsel %vm258, %v666, 0
    %671 = vmatprep.subr.mxu0 0.0
    %672 = vmatpush1.xpose.msra.mxu0 0.0
    %673 = vmatprep.subr.mxu0 0.0
    %674 = vmatpush1.xpose.msra.mxu0 0.0
    %675 = vmatprep.subr.mxu0 0.0
    %676 = vmatpush1.xpose.msra.mxu0 0.0
    %677 = vmatprep.subr.mxu0 0.0
    %678 = vmatpush1.xpose.msra.mxu0 0.0
    %679 = vmatprep.subr.mxu0 0.0
    %680 = vmatpush1.xpose.msra.mxu0 0.0
    %681 = vmatprep.subr.mxu0 0.0
    %682 = vmatpush1.xpose.msra.mxu0 0.0
    %683 = vmatprep.subr.mxu0 0.0
    %684 = vmatpush1.xpose.msra.mxu0 0.0
    %685 = vmatprep.subr.mxu0 0.0
    %686 = vmatpush1.xpose.msra.mxu0 0.0
    %687 = vmatprep.subr.mxu0 0.0
    %688 = vmatpush1.xpose.msra.mxu0 0.0
    %689 = vmatprep.subr.mxu0 0.0
    %690 = vmatpush1.xpose.msra.mxu0 0.0
    %691 = vmatprep.subr.mxu0 0.0
    %692 = vmatpush1.xpose.msra.mxu0 0.0
    %693 = vmatprep.subr.mxu0 0.0
    %694 = vmatpush1.xpose.msra.mxu0 0.0
    %695 = vmatprep.subr.mxu0 0.0
    %696 = vmatpush1.xpose.msra.mxu0 0.0
    %697 = vmatprep.subr.mxu0 0.0
    %698 = vmatpush1.xpose.msra.mxu0 0.0
    %699 = vmatprep.subr.mxu0 0.0
    %700 = vmatpush1.xpose.msra.mxu0 0.0
    %701 = vmatprep.subr.mxu0 0.0
    %702 = vmatpush1.xpose.msra.mxu0 %v669
    %703 = vmatprep.subr.mxu0 0.0
    %704 = vmatpush2.xpose.msra.mxu0 0.0
    %705 = vmatprep.subr.mxu0 0.0
    %706 = vmatpush2.xpose.msra.mxu0 0.0
    %707 = vmatprep.subr.mxu0 0.0
    %708 = vmatpush2.xpose.msra.mxu0 0.0
    %709 = vmatprep.subr.mxu0 0.0
    %710 = vmatpush2.xpose.msra.mxu0 0.0
    %711 = vmatprep.subr.mxu0 0.0
    %712 = vmatpush2.xpose.msra.mxu0 0.0
    %713 = vmatprep.subr.mxu0 0.0
    %714 = vmatpush2.xpose.msra.mxu0 0.0
    %715 = vmatprep.subr.mxu0 0.0
    %716 = vmatpush2.xpose.msra.mxu0 0.0
    %717 = vmatprep.subr.mxu0 0.0
    %718 = vmatpush2.xpose.msra.mxu0 0.0
    %719 = vmatprep.subr.mxu0 0.0
    %720 = vmatpush2.xpose.msra.mxu0 0.0
    %721 = vmatprep.subr.mxu0 0.0
    %722 = vmatpush2.xpose.msra.mxu0 0.0
    %723 = vmatprep.subr.mxu0 0.0
    %724 = vmatpush2.xpose.msra.mxu0 0.0
    %725 = vmatprep.subr.mxu0 0.0
    %726 = vmatpush2.xpose.msra.mxu0 0.0
    %727 = vmatprep.subr.mxu0 0.0
    %728 = vmatpush2.xpose.msra.mxu0 0.0
    %729 = vmatprep.subr.mxu0 0.0
    %730 = vmatpush2.xpose.msra.mxu0 0.0
    %731 = vmatprep.subr.mxu0 0.0
    %732 = vmatpush2.xpose.msra.mxu0 0.0
    %733 = vmatprep.subr.mxu0 0.0
    %734 = vmatpush2.xpose.msra.mxu0 0.0
    %735 = vmatprep.mubr.f32.mxu0 0.0
    %736 = vmatmul.mubr.f32.gmra.mxu0 %v667
    %v737 = vpop.f32.mrf.mxu0
    %v738 = vadd.f32 0.0, %v737
    %v739 = vpop.f32.mrf.mxu0
    %740 = vdwg.mxu0
    %v741 = vsel %vm258, %v660, -inf
    %742 = vmax.xlane.f32.xlu0 %v741
    %v743 = vpop.xlane.xlu0 %742
    %v744 = vsel %vm258, %v738, -inf
    %745 = vmax.xlane.f32.xlu0 %v744
    %v746 = vpop.xlane.xlu0 %745
    %v747 = vsub.f32 %v660, %v743
    %v748 = vsub.f32 %v738, %v746
    %v749 = vmul.f32 %v747, 1.442695
    %v750 = vpow.pop %v749
    %v751 = vmul.f32 %v748, 1.442695
    %v752 = vpow.pop %v751
    %v753 = vsel %vm258, %v750, 0.0
    %754 = vadd.xlane.f32.xlu0 %v753
    %v755 = vpop.xlane.xlu0 %754
    %v756 = vsel %vm258, %v752, 0.0
    %757 = vadd.xlane.f32.xlu0 %v756
    %v758 = vpop.xlane.xlu0 %757
    %v759 = vrcp.pop %v755
    %v760 = vmul.f32 %v750, %v759
    %v761 = vrcp.pop %v758
    %v762 = vmul.f32 %v752, %v761
    %763 = vrot.lane.b32.xlu0 %v248, 88
    %v764 = vpop.permute.xlu0 %763
    %v767 = vsel %vm258, %v760, 0
    %769 = vmatprep.subr.mxu0 0.0
    %770 = vmatpush1.msra.mxu0 0.0
    %771 = vmatprep.subr.mxu0 0.0
    %772 = vmatpush1.msra.mxu0 0.0
    %773 = vmatprep.subr.mxu0 0.0
    %774 = vmatpush1.msra.mxu0 0.0
    %775 = vmatprep.subr.mxu0 0.0
    %776 = vmatpush1.msra.mxu0 0.0
    %777 = vmatprep.subr.mxu0 0.0
    %778 = vmatpush1.msra.mxu0 0.0
    %779 = vmatprep.subr.mxu0 0.0
    %780 = vmatpush1.msra.mxu0 0.0
    %781 = vmatprep.subr.mxu0 0.0
    %782 = vmatpush1.msra.mxu0 0.0
    %783 = vmatprep.subr.mxu0 0.0
    %784 = vmatpush1.msra.mxu0 0.0
    %785 = vmatprep.subr.mxu0 0.0
    %786 = vmatpush1.msra.mxu0 0.0
    %787 = vmatprep.subr.mxu0 0.0
    %788 = vmatpush1.msra.mxu0 0.0
    %789 = vmatprep.subr.mxu0 0.0
    %790 = vmatpush1.msra.mxu0 0.0
    %791 = vmatprep.subr.mxu0 0.0
    %792 = vmatpush1.msra.mxu0 0.0
    %793 = vmatprep.subr.mxu0 0.0
    %794 = vmatpush1.msra.mxu0 0.0
    %795 = vmatprep.subr.mxu0 0.0
    %796 = vmatpush1.msra.mxu0 0.0
    %797 = vmatprep.subr.mxu0 0.0
    %798 = vmatpush1.msra.mxu0 0.0
    %799 = vmatprep.subr.mxu0 0.0
    %800 = vmatpush1.msra.mxu0 %v764
    %801 = vmatprep.subr.mxu0 0.0
    %802 = vmatpush2.msra.mxu0 0.0
    %803 = vmatprep.subr.mxu0 0.0
    %804 = vmatpush2.msra.mxu0 0.0
    %805 = vmatprep.subr.mxu0 0.0
    %806 = vmatpush2.msra.mxu0 0.0
    %807 = vmatprep.subr.mxu0 0.0
    %808 = vmatpush2.msra.mxu0 0.0
    %809 = vmatprep.subr.mxu0 0.0
    %810 = vmatpush2.msra.mxu0 0.0
    %811 = vmatprep.subr.mxu0 0.0
    %812 = vmatpush2.msra.mxu0 0.0
    %813 = vmatprep.subr.mxu0 0.0
    %814 = vmatpush2.msra.mxu0 0.0
    %815 = vmatprep.subr.mxu0 0.0
    %816 = vmatpush2.msra.mxu0 0.0
    %817 = vmatprep.subr.mxu0 0.0
    %818 = vmatpush2.msra.mxu0 0.0
    %819 = vmatprep.subr.mxu0 0.0
    %820 = vmatpush2.msra.mxu0 0.0
    %821 = vmatprep.subr.mxu0 0.0
    %822 = vmatpush2.msra.mxu0 0.0
    %823 = vmatprep.subr.mxu0 0.0
    %824 = vmatpush2.msra.mxu0 0.0
    %825 = vmatprep.subr.mxu0 0.0
    %826 = vmatpush2.msra.mxu0 0.0
    %827 = vmatprep.subr.mxu0 0.0
    %828 = vmatpush2.msra.mxu0 0.0
    %829 = vmatprep.subr.mxu0 0.0
    %830 = vmatpush2.msra.mxu0 0.0
    %831 = vmatprep.subr.mxu0 0.0
    %832 = vmatpush2.msra.mxu0 0.0
    %833 = vmatprep.mubr.f32.mxu0 0.0
    %834 = vmatmul.mubr.f32.gmra.mxu0 %v767
    %v835 = vpop.f32.mrf.mxu0
    %v836 = vadd.f32 0.0, %v835
    %v837 = vpop.f32.mrf.mxu0
    %838 = vdwg.mxu0
    %839 = vrot.lane.b32.xlu0 %v253, 88
    %v840 = vpop.permute.xlu0 %839
    %v843 = vsel %vm258, %v762, 0
    %845 = vmatprep.subr.mxu0 0.0
    %846 = vmatpush1.msra.mxu0 0.0
    %847 = vmatprep.subr.mxu0 0.0
    %848 = vmatpush1.msra.mxu0 0.0
    %849 = vmatprep.subr.mxu0 0.0
    %850 = vmatpush1.msra.mxu0 0.0
    %851 = vmatprep.subr.mxu0 0.0
    %852 = vmatpush1.msra.mxu0 0.0
    %853 = vmatprep.subr.mxu0 0.0
    %854 = vmatpush1.msra.mxu0 0.0
    %855 = vmatprep.subr.mxu0 0.0
    %856 = vmatpush1.msra.mxu0 0.0
    %857 = vmatprep.subr.mxu0 0.0
    %858 = vmatpush1.msra.mxu0 0.0
    %859 = vmatprep.subr.mxu0 0.0
    %860 = vmatpush1.msra.mxu0 0.0
    %861 = vmatprep.subr.mxu0 0.0
    %862 = vmatpush1.msra.mxu0 0.0
    %863 = vmatprep.subr.mxu0 0.0
    %864 = vmatpush1.msra.mxu0 0.0
    %865 = vmatprep.subr.mxu0 0.0
    %866 = vmatpush1.msra.mxu0 0.0
    %867 = vmatprep.subr.mxu0 0.0
    %868 = vmatpush1.msra.mxu0 0.0
    %869 = vmatprep.subr.mxu0 0.0
    %870 = vmatpush1.msra.mxu0 0.0
    %871 = vmatprep.subr.mxu0 0.0
    %872 = vmatpush1.msra.mxu0 0.0
    %873 = vmatprep.subr.mxu0 0.0
    %874 = vmatpush1.msra.mxu0 0.0
    %875 = vmatprep.subr.mxu0 0.0
    %876 = vmatpush1.msra.mxu0 %v840
    %877 = vmatprep.subr.mxu0 0.0
    %878 = vmatpush2.msra.mxu0 0.0
    %879 = vmatprep.subr.mxu0 0.0
    %880 = vmatpush2.msra.mxu0 0.0
    %881 = vmatprep.subr.mxu0 0.0
    %882 = vmatpush2.msra.mxu0 0.0
    %883 = vmatprep.subr.mxu0 0.0
    %884 = vmatpush2.msra.mxu0 0.0
    %885 = vmatprep.subr.mxu0 0.0
    %886 = vmatpush2.msra.mxu0 0.0
    %887 = vmatprep.subr.mxu0 0.0
    %888 = vmatpush2.msra.mxu0 0.0
    %889 = vmatprep.subr.mxu0 0.0
    %890 = vmatpush2.msra.mxu0 0.0
    %891 = vmatprep.subr.mxu0 0.0
    %892 = vmatpush2.msra.mxu0 0.0
    %893 = vmatprep.subr.mxu0 0.0
    %894 = vmatpush2.msra.mxu0 0.0
    %895 = vmatprep.subr.mxu0 0.0
    %896 = vmatpush2.msra.mxu0 0.0
    %897 = vmatprep.subr.mxu0 0.0
    %898 = vmatpush2.msra.mxu0 0.0
    %899 = vmatprep.subr.mxu0 0.0
    %900 = vmatpush2.msra.mxu0 0.0
    %901 = vmatprep.subr.mxu0 0.0
    %902 = vmatpush2.msra.mxu0 0.0
    %903 = vmatprep.subr.mxu0 0.0
    %904 = vmatpush2.msra.mxu0 0.0
    %905 = vmatprep.subr.mxu0 0.0
    %906 = vmatpush2.msra.mxu0 0.0
    %907 = vmatprep.subr.mxu0 0.0
    %908 = vmatpush2.msra.mxu0 0.0
    %909 = vmatprep.mubr.f32.mxu0 0.0
    %910 = vmatmul.mubr.f32.gmra.mxu0 %v843
    %v911 = vpop.f32.mrf.mxu0
    %v912 = vadd.f32 0.0, %v911
    %v913 = vpop.f32.mrf.mxu0
    %914 = vdwg.mxu0
    %915 = vrot.lane.b32.xlu0 %v256, 112
    %v916 = vpop.permute.xlu0 %915
    %917 = vrot.lane.b32.xlu0 %v248, 112
    %v918 = vpop.permute.xlu0 %917
    %v919 = vsel %vm258, %v916, 0
    %v921 = vsel %vm258, %v918, 0
    %923 = vmatprep.subr.mxu0 0.0
    %924 = vmatpush1.xpose.msra.mxu0 0.0
    %925 = vmatprep.subr.mxu0 0.0
    %926 = vmatpush1.xpose.msra.mxu0 0.0
    %927 = vmatprep.subr.mxu0 0.0
    %928 = vmatpush1.xpose.msra.mxu0 0.0
    %929 = vmatprep.subr.mxu0 0.0
    %930 = vmatpush1.xpose.msra.mxu0 0.0
    %931 = vmatprep.subr.mxu0 0.0
    %932 = vmatpush1.xpose.msra.mxu0 0.0
    %933 = vmatprep.subr.mxu0 0.0
    %934 = vmatpush1.xpose.msra.mxu0 0.0
    %935 = vmatprep.subr.mxu0 0.0
    %936 = vmatpush1.xpose.msra.mxu0 0.0
    %937 = vmatprep.subr.mxu0 0.0
    %938 = vmatpush1.xpose.msra.mxu0 0.0
    %939 = vmatprep.subr.mxu0 0.0
    %940 = vmatpush1.xpose.msra.mxu0 0.0
    %941 = vmatprep.subr.mxu0 0.0
    %942 = vmatpush1.xpose.msra.mxu0 0.0
    %943 = vmatprep.subr.mxu0 0.0
    %944 = vmatpush1.xpose.msra.mxu0 0.0
    %945 = vmatprep.subr.mxu0 0.0
    %946 = vmatpush1.xpose.msra.mxu0 0.0
    %947 = vmatprep.subr.mxu0 0.0
    %948 = vmatpush1.xpose.msra.mxu0 0.0
    %949 = vmatprep.subr.mxu0 0.0
    %950 = vmatpush1.xpose.msra.mxu0 0.0
    %951 = vmatprep.subr.mxu0 0.0
    %952 = vmatpush1.xpose.msra.mxu0 0.0
    %953 = vmatprep.subr.mxu0 0.0
    %954 = vmatpush1.xpose.msra.mxu0 %v921
    %955 = vmatprep.subr.mxu0 0.0
    %956 = vmatpush2.xpose.msra.mxu0 0.0
    %957 = vmatprep.subr.mxu0 0.0
    %958 = vmatpush2.xpose.msra.mxu0 0.0
    %959 = vmatprep.subr.mxu0 0.0
    %960 = vmatpush2.xpose.msra.mxu0 0.0
    %961 = vmatprep.subr.mxu0 0.0
    %962 = vmatpush2.xpose.msra.mxu0 0.0
    %963 = vmatprep.subr.mxu0 0.0
    %964 = vmatpush2.xpose.msra.mxu0 0.0
    %965 = vmatprep.subr.mxu0 0.0
    %966 = vmatpush2.xpose.msra.mxu0 0.0
    %967 = vmatprep.subr.mxu0 0.0
    %968 = vmatpush2.xpose.msra.mxu0 0.0
    %969 = vmatprep.subr.mxu0 0.0
    %970 = vmatpush2.xpose.msra.mxu0 0.0
    %971 = vmatprep.subr.mxu0 0.0
    %972 = vmatpush2.xpose.msra.mxu0 0.0
    %973 = vmatprep.subr.mxu0 0.0
    %974 = vmatpush2.xpose.msra.mxu0 0.0
    %975 = vmatprep.subr.mxu0 0.0
    %976 = vmatpush2.xpose.msra.mxu0 0.0
    %977 = vmatprep.subr.mxu0 0.0
    %978 = vmatpush2.xpose.msra.mxu0 0.0
    %979 = vmatprep.subr.mxu0 0.0
    %980 = vmatpush2.xpose.msra.mxu0 0.0
    %981 = vmatprep.subr.mxu0 0.0
    %982 = vmatpush2.xpose.msra.mxu0 0.0
    %983 = vmatprep.subr.mxu0 0.0
    %984 = vmatpush2.xpose.msra.mxu0 0.0
    %985 = vmatprep.subr.mxu0 0.0
    %986 = vmatpush2.xpose.msra.mxu0 0.0
    %987 = vmatprep.mubr.f32.mxu0 0.0
    %988 = vmatmul.mubr.f32.gmra.mxu0 %v919
    %v989 = vpop.f32.mrf.mxu0
    %v990 = vadd.f32 0.0, %v989
    %v991 = vpop.f32.mrf.mxu0
    %992 = vdwg.mxu0
    %993 = vrot.lane.b32.xlu0 %v257, 112
    %v994 = vpop.permute.xlu0 %993
    %995 = vrot.lane.b32.xlu0 %v253, 112
    %v996 = vpop.permute.xlu0 %995
    %v997 = vsel %vm258, %v994, 0
    %v999 = vsel %vm258, %v996, 0
    %1001 = vmatprep.subr.mxu0 0.0
    %1002 = vmatpush1.xpose.msra.mxu0 0.0
    %1003 = vmatprep.subr.mxu0 0.0
    %1004 = vmatpush1.xpose.msra.mxu0 0.0
    %1005 = vmatprep.subr.mxu0 0.0
    %1006 = vmatpush1.xpose.msra.mxu0 0.0
    %1007 = vmatprep.subr.mxu0 0.0
    %1008 = vmatpush1.xpose.msra.mxu0 0.0
    %1009 = vmatprep.subr.mxu0 0.0
    %1010 = vmatpush1.xpose.msra.mxu0 0.0
    %1011 = vmatprep.subr.mxu0 0.0
    %1012 = vmatpush1.xpose.msra.mxu0 0.0
    %1013 = vmatprep.subr.mxu0 0.0
    %1014 = vmatpush1.xpose.msra.mxu0 0.0
    %1015 = vmatprep.subr.mxu0 0.0
    %1016 = vmatpush1.xpose.msra.mxu0 0.0
    %1017 = vmatprep.subr.mxu0 0.0
    %1018 = vmatpush1.xpose.msra.mxu0 0.0
    %1019 = vmatprep.subr.mxu0 0.0
    %1020 = vmatpush1.xpose.msra.mxu0 0.0
    %1021 = vmatprep.subr.mxu0 0.0
    %1022 = vmatpush1.xpose.msra.mxu0 0.0
    %1023 = vmatprep.subr.mxu0 0.0
    %1024 = vmatpush1.xpose.msra.mxu0 0.0
    %1025 = vmatprep.subr.mxu0 0.0
    %1026 = vmatpush1.xpose.msra.mxu0 0.0
    %1027 = vmatprep.subr.mxu0 0.0
    %1028 = vmatpush1.xpose.msra.mxu0 0.0
    %1029 = vmatprep.subr.mxu0 0.0
    %1030 = vmatpush1.xpose.msra.mxu0 0.0
    %1031 = vmatprep.subr.mxu0 0.0
    %1032 = vmatpush1.xpose.msra.mxu0 %v999
    %1033 = vmatprep.subr.mxu0 0.0
    %1034 = vmatpush2.xpose.msra.mxu0 0.0
    %1035 = vmatprep.subr.mxu0 0.0
    %1036 = vmatpush2.xpose.msra.mxu0 0.0
    %1037 = vmatprep.subr.mxu0 0.0
    %1038 = vmatpush2.xpose.msra.mxu0 0.0
    %1039 = vmatprep.subr.mxu0 0.0
    %1040 = vmatpush2.xpose.msra.mxu0 0.0
    %1041 = vmatprep.subr.mxu0 0.0
    %1042 = vmatpush2.xpose.msra.mxu0 0.0
    %1043 = vmatprep.subr.mxu0 0.0
    %1044 = vmatpush2.xpose.msra.mxu0 0.0
    %1045 = vmatprep.subr.mxu0 0.0
    %1046 = vmatpush2.xpose.msra.mxu0 0.0
    %1047 = vmatprep.subr.mxu0 0.0
    %1048 = vmatpush2.xpose.msra.mxu0 0.0
    %1049 = vmatprep.subr.mxu0 0.0
    %1050 = vmatpush2.xpose.msra.mxu0 0.0
    %1051 = vmatprep.subr.mxu0 0.0
    %1052 = vmatpush2.xpose.msra.mxu0 0.0
    %1053 = vmatprep.subr.mxu0 0.0
    %1054 = vmatpush2.xpose.msra.mxu0 0.0
    %1055 = vmatprep.subr.mxu0 0.0
    %1056 = vmatpush2.xpose.msra.mxu0 0.0
    %1057 = vmatprep.subr.mxu0 0.0
    %1058 = vmatpush2.xpose.msra.mxu0 0.0
    %1059 = vmatprep.subr.mxu0 0.0
    %1060 = vmatpush2.xpose.msra.mxu0 0.0
    %1061 = vmatprep.subr.mxu0 0.0
    %1062 = vmatpush2.xpose.msra.mxu0 0.0
    %1063 = vmatprep.subr.mxu0 0.0
    %1064 = vmatpush2.xpose.msra.mxu0 0.0
    %1065 = vmatprep.mubr.f32.mxu0 0.0
    %1066 = vmatmul.mubr.f32.gmra.mxu0 %v997
    %v1067 = vpop.f32.mrf.mxu0
    %v1068 = vadd.f32 0.0, %v1067
    %v1069 = vpop.f32.mrf.mxu0
    %1070 = vdwg.mxu0
    %v1071 = vsel %vm258, %v990, -inf
    %1072 = vmax.xlane.f32.xlu0 %v1071
    %v1073 = vpop.xlane.xlu0 %1072
    %v1074 = vsel %vm258, %v1068, -inf
    %1075 = vmax.xlane.f32.xlu0 %v1074
    %v1076 = vpop.xlane.xlu0 %1075
    %v1077 = vsub.f32 %v990, %v1073
    %v1078 = vsub.f32 %v1068, %v1076
    %v1079 = vmul.f32 %v1077, 1.442695
    %v1080 = vpow.pop %v1079
    %v1081 = vmul.f32 %v1078, 1.442695
    %v1082 = vpow.pop %v1081
    %v1083 = vsel %vm258, %v1080, 0.0
    %1084 = vadd.xlane.f32.xlu0 %v1083
    %v1085 = vpop.xlane.xlu0 %1084
    %v1086 = vsel %vm258, %v1082, 0.0
    %1087 = vadd.xlane.f32.xlu0 %v1086
    %v1088 = vpop.xlane.xlu0 %1087
    %v1089 = vrcp.pop %v1085
    %v1090 = vmul.f32 %v1080, %v1089
    %v1091 = vrcp.pop %v1088
    %v1092 = vmul.f32 %v1082, %v1091
    %1093 = vrot.lane.b32.xlu0 %v248, 80
    %v1094 = vpop.permute.xlu0 %1093
    %v1097 = vsel %vm258, %v1090, 0
    %1099 = vmatprep.subr.mxu0 0.0
    %1100 = vmatpush1.msra.mxu0 0.0
    %1101 = vmatprep.subr.mxu0 0.0
    %1102 = vmatpush1.msra.mxu0 0.0
    %1103 = vmatprep.subr.mxu0 0.0
    %1104 = vmatpush1.msra.mxu0 0.0
    %1105 = vmatprep.subr.mxu0 0.0
    %1106 = vmatpush1.msra.mxu0 0.0
    %1107 = vmatprep.subr.mxu0 0.0
    %1108 = vmatpush1.msra.mxu0 0.0
    %1109 = vmatprep.subr.mxu0 0.0
    %1110 = vmatpush1.msra.mxu0 0.0
    %1111 = vmatprep.subr.mxu0 0.0
    %1112 = vmatpush1.msra.mxu0 0.0
    %1113 = vmatprep.subr.mxu0 0.0
    %1114 = vmatpush1.msra.mxu0 0.0
    %1115 = vmatprep.subr.mxu0 0.0
    %1116 = vmatpush1.msra.mxu0 0.0
    %1117 = vmatprep.subr.mxu0 0.0
    %1118 = vmatpush1.msra.mxu0 0.0
    %1119 = vmatprep.subr.mxu0 0.0
    %1120 = vmatpush1.msra.mxu0 0.0
    %1121 = vmatprep.subr.mxu0 0.0
    %1122 = vmatpush1.msra.mxu0 0.0
    %1123 = vmatprep.subr.mxu0 0.0
    %1124 = vmatpush1.msra.mxu0 0.0
    %1125 = vmatprep.subr.mxu0 0.0
    %1126 = vmatpush1.msra.mxu0 0.0
    %1127 = vmatprep.subr.mxu0 0.0
    %1128 = vmatpush1.msra.mxu0 0.0
    %1129 = vmatprep.subr.mxu0 0.0
    %1130 = vmatpush1.msra.mxu0 %v1094
    %1131 = vmatprep.subr.mxu0 0.0
    %1132 = vmatpush2.msra.mxu0 0.0
    %1133 = vmatprep.subr.mxu0 0.0
    %1134 = vmatpush2.msra.mxu0 0.0
    %1135 = vmatprep.subr.mxu0 0.0
    %1136 = vmatpush2.msra.mxu0 0.0
    %1137 = vmatprep.subr.mxu0 0.0
    %1138 = vmatpush2.msra.mxu0 0.0
    %1139 = vmatprep.subr.mxu0 0.0
    %1140 = vmatpush2.msra.mxu0 0.0
    %1141 = vmatprep.subr.mxu0 0.0
    %1142 = vmatpush2.msra.mxu0 0.0
    %1143 = vmatprep.subr.mxu0 0.0
    %1144 = vmatpush2.msra.mxu0 0.0
    %1145 = vmatprep.subr.mxu0 0.0
    %1146 = vmatpush2.msra.mxu0 0.0
    %1147 = vmatprep.subr.mxu0 0.0
    %1148 = vmatpush2.msra.mxu0 0.0
    %1149 = vmatprep.subr.mxu0 0.0
    %1150 = vmatpush2.msra.mxu0 0.0
    %1151 = vmatprep.subr.mxu0 0.0
    %1152 = vmatpush2.msra.mxu0 0.0
    %1153 = vmatprep.subr.mxu0 0.0
    %1154 = vmatpush2.msra.mxu0 0.0
    %1155 = vmatprep.subr.mxu0 0.0
    %1156 = vmatpush2.msra.mxu0 0.0
    %1157 = vmatprep.subr.mxu0 0.0
    %1158 = vmatpush2.msra.mxu0 0.0
    %1159 = vmatprep.subr.mxu0 0.0
    %1160 = vmatpush2.msra.mxu0 0.0
    %1161 = vmatprep.subr.mxu0 0.0
    %1162 = vmatpush2.msra.mxu0 0.0
    %1163 = vmatprep.mubr.f32.mxu0 0.0
    %1164 = vmatmul.mubr.f32.gmra.mxu0 %v1097
    %v1165 = vpop.f32.mrf.mxu0
    %v1166 = vadd.f32 0.0, %v1165
    %v1167 = vpop.f32.mrf.mxu0
    %1168 = vdwg.mxu0
    %1169 = vrot.lane.b32.xlu0 %v253, 80
    %v1170 = vpop.permute.xlu0 %1169
    %v1173 = vsel %vm258, %v1092, 0
    %1175 = vmatprep.subr.mxu0 0.0
    %1176 = vmatpush1.msra.mxu0 0.0
    %1177 = vmatprep.subr.mxu0 0.0
    %1178 = vmatpush1.msra.mxu0 0.0
    %1179 = vmatprep.subr.mxu0 0.0
    %1180 = vmatpush1.msra.mxu0 0.0
    %1181 = vmatprep.subr.mxu0 0.0
    %1182 = vmatpush1.msra.mxu0 0.0
    %1183 = vmatprep.subr.mxu0 0.0
    %1184 = vmatpush1.msra.mxu0 0.0
    %1185 = vmatprep.subr.mxu0 0.0
    %1186 = vmatpush1.msra.mxu0 0.0
    %1187 = vmatprep.subr.mxu0 0.0
    %1188 = vmatpush1.msra.mxu0 0.0
    %1189 = vmatprep.subr.mxu0 0.0
    %1190 = vmatpush1.msra.mxu0 0.0
    %1191 = vmatprep.subr.mxu0 0.0
    %1192 = vmatpush1.msra.mxu0 0.0
    %1193 = vmatprep.subr.mxu0 0.0
    %1194 = vmatpush1.msra.mxu0 0.0
    %1195 = vmatprep.subr.mxu0 0.0
    %1196 = vmatpush1.msra.mxu0 0.0
    %1197 = vmatprep.subr.mxu0 0.0
    %1198 = vmatpush1.msra.mxu0 0.0
    %1199 = vmatprep.subr.mxu0 0.0
    %1200 = vmatpush1.msra.mxu0 0.0
    %1201 = vmatprep.subr.mxu0 0.0
    %1202 = vmatpush1.msra.mxu0 0.0
    %1203 = vmatprep.subr.mxu0 0.0
    %1204 = vmatpush1.msra.mxu0 0.0
    %1205 = vmatprep.subr.mxu0 0.0
    %1206 = vmatpush1.msra.mxu0 %v1170
    %1207 = vmatprep.subr.mxu0 0.0
    %1208 = vmatpush2.msra.mxu0 0.0
    %1209 = vmatprep.subr.mxu0 0.0
    %1210 = vmatpush2.msra.mxu0 0.0
    %1211 = vmatprep.subr.mxu0 0.0
    %1212 = vmatpush2.msra.mxu0 0.0
    %1213 = vmatprep.subr.mxu0 0.0
    %1214 = vmatpush2.msra.mxu0 0.0
    %1215 = vmatprep.subr.mxu0 0.0
    %1216 = vmatpush2.msra.mxu0 0.0
    %1217 = vmatprep.subr.mxu0 0.0
    %1218 = vmatpush2.msra.mxu0 0.0
    %1219 = vmatprep.subr.mxu0 0.0
    %1220 = vmatpush2.msra.mxu0 0.0
    %1221 = vmatprep.subr.mxu0 0.0
    %1222 = vmatpush2.msra.mxu0 0.0
    %1223 = vmatprep.subr.mxu0 0.0
    %1224 = vmatpush2.msra.mxu0 0.0
    %1225 = vmatprep.subr.mxu0 0.0
    %1226 = vmatpush2.msra.mxu0 0.0
    %1227 = vmatprep.subr.mxu0 0.0
    %1228 = vmatpush2.msra.mxu0 0.0
    %1229 = vmatprep.subr.mxu0 0.0
    %1230 = vmatpush2.msra.mxu0 0.0
    %1231 = vmatprep.subr.mxu0 0.0
    %1232 = vmatpush2.msra.mxu0 0.0
    %1233 = vmatprep.subr.mxu0 0.0
    %1234 = vmatpush2.msra.mxu0 0.0
    %1235 = vmatprep.subr.mxu0 0.0
    %1236 = vmatpush2.msra.mxu0 0.0
    %1237 = vmatprep.subr.mxu0 0.0
    %1238 = vmatpush2.msra.mxu0 0.0
    %1239 = vmatprep.mubr.f32.mxu0 0.0
    %1240 = vmatmul.mubr.f32.gmra.mxu0 %v1173
    %v1241 = vpop.f32.mrf.mxu0
    %v1242 = vadd.f32 0.0, %v1241
    %v1243 = vpop.f32.mrf.mxu0
    %1244 = vdwg.mxu0
    %1245 = vrot.lane.b32.xlu0 %v256, 104
    %v1246 = vpop.permute.xlu0 %1245
    %1247 = vrot.lane.b32.xlu0 %v248, 104
    %v1248 = vpop.permute.xlu0 %1247
    %v1249 = vsel %vm258, %v1246, 0
    %v1251 = vsel %vm258, %v1248, 0
    %1253 = vmatprep.subr.mxu0 0.0
    %1254 = vmatpush1.xpose.msra.mxu0 0.0
    %1255 = vmatprep.subr.mxu0 0.0
    %1256 = vmatpush1.xpose.msra.mxu0 0.0
    %1257 = vmatprep.subr.mxu0 0.0
    %1258 = vmatpush1.xpose.msra.mxu0 0.0
    %1259 = vmatprep.subr.mxu0 0.0
    %1260 = vmatpush1.xpose.msra.mxu0 0.0
    %1261 = vmatprep.subr.mxu0 0.0
    %1262 = vmatpush1.xpose.msra.mxu0 0.0
    %1263 = vmatprep.subr.mxu0 0.0
    %1264 = vmatpush1.xpose.msra.mxu0 0.0
    %1265 = vmatprep.subr.mxu0 0.0
    %1266 = vmatpush1.xpose.msra.mxu0 0.0
    %1267 = vmatprep.subr.mxu0 0.0
    %1268 = vmatpush1.xpose.msra.mxu0 0.0
    %1269 = vmatprep.subr.mxu0 0.0
    %1270 = vmatpush1.xpose.msra.mxu0 0.0
    %1271 = vmatprep.subr.mxu0 0.0
    %1272 = vmatpush1.xpose.msra.mxu0 0.0
    %1273 = vmatprep.subr.mxu0 0.0
    %1274 = vmatpush1.xpose.msra.mxu0 0.0
    %1275 = vmatprep.subr.mxu0 0.0
    %1276 = vmatpush1.xpose.msra.mxu0 0.0
    %1277 = vmatprep.subr.mxu0 0.0
    %1278 = vmatpush1.xpose.msra.mxu0 0.0
    %1279 = vmatprep.subr.mxu0 0.0
    %1280 = vmatpush1.xpose.msra.mxu0 0.0
    %1281 = vmatprep.subr.mxu0 0.0
    %1282 = vmatpush1.xpose.msra.mxu0 0.0
    %1283 = vmatprep.subr.mxu0 0.0
    %1284 = vmatpush1.xpose.msra.mxu0 %v1251
    %1285 = vmatprep.subr.mxu0 0.0
    %1286 = vmatpush2.xpose.msra.mxu0 0.0
    %1287 = vmatprep.subr.mxu0 0.0
    %1288 = vmatpush2.xpose.msra.mxu0 0.0
    %1289 = vmatprep.subr.mxu0 0.0
    %1290 = vmatpush2.xpose.msra.mxu0 0.0
    %1291 = vmatprep.subr.mxu0 0.0
    %1292 = vmatpush2.xpose.msra.mxu0 0.0
    %1293 = vmatprep.subr.mxu0 0.0
    %1294 = vmatpush2.xpose.msra.mxu0 0.0
    %1295 = vmatprep.subr.mxu0 0.0
    %1296 = vmatpush2.xpose.msra.mxu0 0.0
    %1297 = vmatprep.subr.mxu0 0.0
    %1298 = vmatpush2.xpose.msra.mxu0 0.0
    %1299 = vmatprep.subr.mxu0 0.0
    %1300 = vmatpush2.xpose.msra.mxu0 0.0
    %1301 = vmatprep.subr.mxu0 0.0
    %1302 = vmatpush2.xpose.msra.mxu0 0.0
    %1303 = vmatprep.subr.mxu0 0.0
    %1304 = vmatpush2.xpose.msra.mxu0 0.0
    %1305 = vmatprep.subr.mxu0 0.0
    %1306 = vmatpush2.xpose.msra.mxu0 0.0
    %1307 = vmatprep.subr.mxu0 0.0
    %1308 = vmatpush2.xpose.msra.mxu0 0.0
    %1309 = vmatprep.subr.mxu0 0.0
    %1310 = vmatpush2.xpose.msra.mxu0 0.0
    %1311 = vmatprep.subr.mxu0 0.0
    %1312 = vmatpush2.xpose.msra.mxu0 0.0
    %1313 = vmatprep.subr.mxu0 0.0
    %1314 = vmatpush2.xpose.msra.mxu0 0.0
    %1315 = vmatprep.subr.mxu0 0.0
    %1316 = vmatpush2.xpose.msra.mxu0 0.0
    %1317 = vmatprep.mubr.f32.mxu0 0.0
    %1318 = vmatmul.mubr.f32.gmra.mxu0 %v1249
    %v1319 = vpop.f32.mrf.mxu0
    %v1320 = vadd.f32 0.0, %v1319
    %v1321 = vpop.f32.mrf.mxu0
    %1322 = vdwg.mxu0
    %1323 = vrot.lane.b32.xlu0 %v257, 104
    %v1324 = vpop.permute.xlu0 %1323
    %1325 = vrot.lane.b32.xlu0 %v253, 104
    %v1326 = vpop.permute.xlu0 %1325
    %v1327 = vsel %vm258, %v1324, 0
    %v1329 = vsel %vm258, %v1326, 0
    %1331 = vmatprep.subr.mxu0 0.0
    %1332 = vmatpush1.xpose.msra.mxu0 0.0
    %1333 = vmatprep.subr.mxu0 0.0
    %1334 = vmatpush1.xpose.msra.mxu0 0.0
    %1335 = vmatprep.subr.mxu0 0.0
    %1336 = vmatpush1.xpose.msra.mxu0 0.0
    %1337 = vmatprep.subr.mxu0 0.0
    %1338 = vmatpush1.xpose.msra.mxu0 0.0
    %1339 = vmatprep.subr.mxu0 0.0
    %1340 = vmatpush1.xpose.msra.mxu0 0.0
    %1341 = vmatprep.subr.mxu0 0.0
    %1342 = vmatpush1.xpose.msra.mxu0 0.0
    %1343 = vmatprep.subr.mxu0 0.0
    %1344 = vmatpush1.xpose.msra.mxu0 0.0
    %1345 = vmatprep.subr.mxu0 0.0
    %1346 = vmatpush1.xpose.msra.mxu0 0.0
    %1347 = vmatprep.subr.mxu0 0.0
    %1348 = vmatpush1.xpose.msra.mxu0 0.0
    %1349 = vmatprep.subr.mxu0 0.0
    %1350 = vmatpush1.xpose.msra.mxu0 0.0
    %1351 = vmatprep.subr.mxu0 0.0
    %1352 = vmatpush1.xpose.msra.mxu0 0.0
    %1353 = vmatprep.subr.mxu0 0.0
    %1354 = vmatpush1.xpose.msra.mxu0 0.0
    %1355 = vmatprep.subr.mxu0 0.0
    %1356 = vmatpush1.xpose.msra.mxu0 0.0
    %1357 = vmatprep.subr.mxu0 0.0
    %1358 = vmatpush1.xpose.msra.mxu0 0.0
    %1359 = vmatprep.subr.mxu0 0.0
    %1360 = vmatpush1.xpose.msra.mxu0 0.0
    %1361 = vmatprep.subr.mxu0 0.0
    %1362 = vmatpush1.xpose.msra.mxu0 %v1329
    %1363 = vmatprep.subr.mxu0 0.0
    %1364 = vmatpush2.xpose.msra.mxu0 0.0
    %1365 = vmatprep.subr.mxu0 0.0
    %1366 = vmatpush2.xpose.msra.mxu0 0.0
    %1367 = vmatprep.subr.mxu0 0.0
    %1368 = vmatpush2.xpose.msra.mxu0 0.0
    %1369 = vmatprep.subr.mxu0 0.0
    %1370 = vmatpush2.xpose.msra.mxu0 0.0
    %1371 = vmatprep.subr.mxu0 0.0
    %1372 = vmatpush2.xpose.msra.mxu0 0.0
    %1373 = vmatprep.subr.mxu0 0.0
    %1374 = vmatpush2.xpose.msra.mxu0 0.0
    %1375 = vmatprep.subr.mxu0 0.0
    %1376 = vmatpush2.xpose.msra.mxu0 0.0
    %1377 = vmatprep.subr.mxu0 0.0
    %1378 = vmatpush2.xpose.msra.mxu0 0.0
    %1379 = vmatprep.subr.mxu0 0.0
    %1380 = vmatpush2.xpose.msra.mxu0 0.0
    %1381 = vmatprep.subr.mxu0 0.0
    %1382 = vmatpush2.xpose.msra.mxu0 0.0
    %1383 = vmatprep.subr.mxu0 0.0
    %1384 = vmatpush2.xpose.msra.mxu0 0.0
    %1385 = vmatprep.subr.mxu0 0.0
    %1386 = vmatpush2.xpose.msra.mxu0 0.0
    %1387 = vmatprep.subr.mxu0 0.0
    %1388 = vmatpush2.xpose.msra.mxu0 0.0
    %1389 = vmatprep.subr.mxu0 0.0
    %1390 = vmatpush2.xpose.msra.mxu0 0.0
    %1391 = vmatprep.subr.mxu0 0.0
    %1392 = vmatpush2.xpose.msra.mxu0 0.0
    %1393 = vmatprep.subr.mxu0 0.0
    %1394 = vmatpush2.xpose.msra.mxu0 0.0
    %1395 = vmatprep.mubr.f32.mxu0 0.0
    %1396 = vmatmul.mubr.f32.gmra.mxu0 %v1327
    %v1397 = vpop.f32.mrf.mxu0
    %v1398 = vadd.f32 0.0, %v1397
    %v1399 = vpop.f32.mrf.mxu0
    %1400 = vdwg.mxu0
    %v1401 = vsel %vm258, %v1320, -inf
    %1402 = vmax.xlane.f32.xlu0 %v1401
    %v1403 = vpop.xlane.xlu0 %1402
    %v1404 = vsel %vm258, %v1398, -inf
    %1405 = vmax.xlane.f32.xlu0 %v1404
    %v1406 = vpop.xlane.xlu0 %1405
    %v1407 = vsub.f32 %v1320, %v1403
    %v1408 = vsub.f32 %v1398, %v1406
    %v1409 = vmul.f32 %v1407, 1.442695
    %v1410 = vpow.pop %v1409
    %v1411 = vmul.f32 %v1408, 1.442695
    %v1412 = vpow.pop %v1411
    %v1413 = vsel %vm258, %v1410, 0.0
    %1414 = vadd.xlane.f32.xlu0 %v1413
    %v1415 = vpop.xlane.xlu0 %1414
    %v1416 = vsel %vm258, %v1412, 0.0
    %1417 = vadd.xlane.f32.xlu0 %v1416
    %v1418 = vpop.xlane.xlu0 %1417
    %v1419 = vrcp.pop %v1415
    %v1420 = vmul.f32 %v1410, %v1419
    %v1421 = vrcp.pop %v1418
    %v1422 = vmul.f32 %v1412, %v1421
    %1423 = vrot.lane.b32.xlu0 %v248, 72
    %v1424 = vpop.permute.xlu0 %1423
    %v1427 = vsel %vm258, %v1420, 0
    %1429 = vmatprep.subr.mxu0 0.0
    %1430 = vmatpush1.msra.mxu0 0.0
    %1431 = vmatprep.subr.mxu0 0.0
    %1432 = vmatpush1.msra.mxu0 0.0
    %1433 = vmatprep.subr.mxu0 0.0
    %1434 = vmatpush1.msra.mxu0 0.0
    %1435 = vmatprep.subr.mxu0 0.0
    %1436 = vmatpush1.msra.mxu0 0.0
    %1437 = vmatprep.subr.mxu0 0.0
    %1438 = vmatpush1.msra.mxu0 0.0
    %1439 = vmatprep.subr.mxu0 0.0
    %1440 = vmatpush1.msra.mxu0 0.0
    %1441 = vmatprep.subr.mxu0 0.0
    %1442 = vmatpush1.msra.mxu0 0.0
    %1443 = vmatprep.subr.mxu0 0.0
    %1444 = vmatpush1.msra.mxu0 0.0
    %1445 = vmatprep.subr.mxu0 0.0
    %1446 = vmatpush1.msra.mxu0 0.0
    %1447 = vmatprep.subr.mxu0 0.0
    %1448 = vmatpush1.msra.mxu0 0.0
    %1449 = vmatprep.subr.mxu0 0.0
    %1450 = vmatpush1.msra.mxu0 0.0
    %1451 = vmatprep.subr.mxu0 0.0
    %1452 = vmatpush1.msra.mxu0 0.0
    %1453 = vmatprep.subr.mxu0 0.0
    %1454 = vmatpush1.msra.mxu0 0.0
    %1455 = vmatprep.subr.mxu0 0.0
    %1456 = vmatpush1.msra.mxu0 0.0
    %1457 = vmatprep.subr.mxu0 0.0
    %1458 = vmatpush1.msra.mxu0 0.0
    %1459 = vmatprep.subr.mxu0 0.0
    %1460 = vmatpush1.msra.mxu0 %v1424
    %1461 = vmatprep.subr.mxu0 0.0
    %1462 = vmatpush2.msra.mxu0 0.0
    %1463 = vmatprep.subr.mxu0 0.0
    %1464 = vmatpush2.msra.mxu0 0.0
    %1465 = vmatprep.subr.mxu0 0.0
    %1466 = vmatpush2.msra.mxu0 0.0
    %1467 = vmatprep.subr.mxu0 0.0
    %1468 = vmatpush2.msra.mxu0 0.0
    %1469 = vmatprep.subr.mxu0 0.0
    %1470 = vmatpush2.msra.mxu0 0.0
    %1471 = vmatprep.subr.mxu0 0.0
    %1472 = vmatpush2.msra.mxu0 0.0
    %1473 = vmatprep.subr.mxu0 0.0
    %1474 = vmatpush2.msra.mxu0 0.0
    %1475 = vmatprep.subr.mxu0 0.0
    %1476 = vmatpush2.msra.mxu0 0.0
    %1477 = vmatprep.subr.mxu0 0.0
    %1478 = vmatpush2.msra.mxu0 0.0
    %1479 = vmatprep.subr.mxu0 0.0
    %1480 = vmatpush2.msra.mxu0 0.0
    %1481 = vmatprep.subr.mxu0 0.0
    %1482 = vmatpush2.msra.mxu0 0.0
    %1483 = vmatprep.subr.mxu0 0.0
    %1484 = vmatpush2.msra.mxu0 0.0
    %1485 = vmatprep.subr.mxu0 0.0
    %1486 = vmatpush2.msra.mxu0 0.0
    %1487 = vmatprep.subr.mxu0 0.0
    %1488 = vmatpush2.msra.mxu0 0.0
    %1489 = vmatprep.subr.mxu0 0.0
    %1490 = vmatpush2.msra.mxu0 0.0
    %1491 = vmatprep.subr.mxu0 0.0
    %1492 = vmatpush2.msra.mxu0 0.0
    %1493 = vmatprep.mubr.f32.mxu0 0.0
    %1494 = vmatmul.mubr.f32.gmra.mxu0 %v1427
    %v1495 = vpop.f32.mrf.mxu0
    %v1496 = vadd.f32 0.0, %v1495
    %v1497 = vpop.f32.mrf.mxu0
    %1498 = vdwg.mxu0
    %1499 = vrot.lane.b32.xlu0 %v253, 72
    %v1500 = vpop.permute.xlu0 %1499
    %v1503 = vsel %vm258, %v1422, 0
    %1505 = vmatprep.subr.mxu0 0.0
    %1506 = vmatpush1.msra.mxu0 0.0
    %1507 = vmatprep.subr.mxu0 0.0
    %1508 = vmatpush1.msra.mxu0 0.0
    %1509 = vmatprep.subr.mxu0 0.0
    %1510 = vmatpush1.msra.mxu0 0.0
    %1511 = vmatprep.subr.mxu0 0.0
    %1512 = vmatpush1.msra.mxu0 0.0
    %1513 = vmatprep.subr.mxu0 0.0
    %1514 = vmatpush1.msra.mxu0 0.0
    %1515 = vmatprep.subr.mxu0 0.0
    %1516 = vmatpush1.msra.mxu0 0.0
    %1517 = vmatprep.subr.mxu0 0.0
    %1518 = vmatpush1.msra.mxu0 0.0
    %1519 = vmatprep.subr.mxu0 0.0
    %1520 = vmatpush1.msra.mxu0 0.0
    %1521 = vmatprep.subr.mxu0 0.0
    %1522 = vmatpush1.msra.mxu0 0.0
    %1523 = vmatprep.subr.mxu0 0.0
    %1524 = vmatpush1.msra.mxu0 0.0
    %1525 = vmatprep.subr.mxu0 0.0
    %1526 = vmatpush1.msra.mxu0 0.0
    %1527 = vmatprep.subr.mxu0 0.0
    %1528 = vmatpush1.msra.mxu0 0.0
    %1529 = vmatprep.subr.mxu0 0.0
    %1530 = vmatpush1.msra.mxu0 0.0
    %1531 = vmatprep.subr.mxu0 0.0
    %1532 = vmatpush1.msra.mxu0 0.0
    %1533 = vmatprep.subr.mxu0 0.0
    %1534 = vmatpush1.msra.mxu0 0.0
    %1535 = vmatprep.subr.mxu0 0.0
    %1536 = vmatpush1.msra.mxu0 %v1500
    %1537 = vmatprep.subr.mxu0 0.0
    %1538 = vmatpush2.msra.mxu0 0.0
    %1539 = vmatprep.subr.mxu0 0.0
    %1540 = vmatpush2.msra.mxu0 0.0
    %1541 = vmatprep.subr.mxu0 0.0
    %1542 = vmatpush2.msra.mxu0 0.0
    %1543 = vmatprep.subr.mxu0 0.0
    %1544 = vmatpush2.msra.mxu0 0.0
    %1545 = vmatprep.subr.mxu0 0.0
    %1546 = vmatpush2.msra.mxu0 0.0
    %1547 = vmatprep.subr.mxu0 0.0
    %1548 = vmatpush2.msra.mxu0 0.0
    %1549 = vmatprep.subr.mxu0 0.0
    %1550 = vmatpush2.msra.mxu0 0.0
    %1551 = vmatprep.subr.mxu0 0.0
    %1552 = vmatpush2.msra.mxu0 0.0
    %1553 = vmatprep.subr.mxu0 0.0
    %1554 = vmatpush2.msra.mxu0 0.0
    %1555 = vmatprep.subr.mxu0 0.0
    %1556 = vmatpush2.msra.mxu0 0.0
    %1557 = vmatprep.subr.mxu0 0.0
    %1558 = vmatpush2.msra.mxu0 0.0
    %1559 = vmatprep.subr.mxu0 0.0
    %1560 = vmatpush2.msra.mxu0 0.0
    %1561 = vmatprep.subr.mxu0 0.0
    %1562 = vmatpush2.msra.mxu0 0.0
    %1563 = vmatprep.subr.mxu0 0.0
    %1564 = vmatpush2.msra.mxu0 0.0
    %1565 = vmatprep.subr.mxu0 0.0
    %1566 = vmatpush2.msra.mxu0 0.0
    %1567 = vmatprep.subr.mxu0 0.0
    %1568 = vmatpush2.msra.mxu0 0.0
    %1569 = vmatprep.mubr.f32.mxu0 0.0
    %1570 = vmatmul.mubr.f32.gmra.mxu0 %v1503
    %v1571 = vpop.f32.mrf.mxu0
    %v1572 = vadd.f32 0.0, %v1571
    %v1573 = vpop.f32.mrf.mxu0
    %1574 = vdwg.mxu0
    %1577 = vrot.lane.b32.xlu0 %v836, 8
    %v1578 = vpop.permute.xlu0 %1577
    %1579 = vrot.lane.b32.xlu0 %v912, 8
    %v1580 = vpop.permute.xlu0 %1579
    %1585 = vrot.lane.b32.xlu0 %v1166, 16
    %v1586 = vpop.permute.xlu0 %1585
    %1587 = vrot.lane.b32.xlu0 %v1242, 16
    %v1588 = vpop.permute.xlu0 %1587
    %1593 = vrot.lane.b32.xlu0 %v1496, 24
    %v1594 = vpop.permute.xlu0 %1593
    %1595 = vrot.lane.b32.xlu0 %v1572, 24
    %v1596 = vpop.permute.xlu0 %1595
    %v1599 = vsel %vm258, %v506, %v1578
    %v1600 = vsel %vm258, %v582, %v1580
    %vm1601 = vcmask 130048
    %v1602 = vsel %vm1601, %v1599, %v1586
    %v1603 = vsel %vm1601, %v1600, %v1588
    %vm1604 = vcmask 195584
    %v1605 = vsel %vm1604, %v1602, %v1594
    %v1606 = vsel %vm1604, %v1603, %v1596
    %1607 = vrot.lane.b32.xlu0 %v59, 32
    %v1608 = vpop.permute.xlu0 %1607
    %1609 = vrot.lane.b32.xlu0 %v60, 32
    %v1610 = vpop.permute.xlu0 %1609
    %1611 = vrot.lane.b32.xlu0 %v61, 32
    %v1612 = vpop.permute.xlu0 %1611
    %1613 = vrot.lane.b32.xlu0 %v62, 32
    %v1614 = vpop.permute.xlu0 %1613
    %1619 = vrot.lane.b32.xlu0 %v72, 32
    %v1620 = vpop.permute.xlu0 %1619
    %v1623 = vsel %vm74, %v1605, 0
    %v1626 = vsel %vm74, %v1606, 0
    %1628 = vmatprep.subr.mxu0 0.0
    %1629 = vmatpush1.msra.mxu0 0.0
    %1630 = vmatprep.subr.mxu0 0.0
    %1631 = vmatpush1.msra.mxu0 0.0
    %1632 = vmatprep.subr.mxu0 0.0
    %1633 = vmatpush1.msra.mxu0 0.0
    %1634 = vmatprep.subr.mxu0 0.0
    %1635 = vmatpush1.msra.mxu0 0.0
    %1636 = vmatprep.subr.mxu0 0.0
    %1637 = vmatpush1.msra.mxu0 0.0
    %1638 = vmatprep.subr.mxu0 0.0
    %1639 = vmatpush1.msra.mxu0 0.0
    %1640 = vmatprep.subr.mxu0 0.0
    %1641 = vmatpush1.msra.mxu0 0.0
    %1642 = vmatprep.subr.mxu0 0.0
    %1643 = vmatpush1.msra.mxu0 0.0
    %1644 = vmatprep.subr.mxu0 0.0
    %1645 = vmatpush1.msra.mxu0 0.0
    %1646 = vmatprep.subr.mxu0 0.0
    %1647 = vmatpush1.msra.mxu0 0.0
    %1648 = vmatprep.subr.mxu0 0.0
    %1649 = vmatpush1.msra.mxu0 0.0
    %1650 = vmatprep.subr.mxu0 0.0
    %1651 = vmatpush1.msra.mxu0 0.0
    %1652 = vmatprep.subr.mxu0 0.0
    %1653 = vmatpush1.msra.mxu0 %v1614
    %1654 = vmatprep.subr.mxu0 0.0
    %1655 = vmatpush1.msra.mxu0 %v1612
    %1656 = vmatprep.subr.mxu0 0.0
    %1657 = vmatpush1.msra.mxu0 %v1610
    %1658 = vmatprep.subr.mxu0 0.0
    %1659 = vmatpush1.msra.mxu0 %v1608
    %1660 = vmatprep.subr.mxu0 0.0
    %1661 = vmatpush2.msra.mxu0 0.0
    %1662 = vmatprep.subr.mxu0 0.0
    %1663 = vmatpush2.msra.mxu0 0.0
    %1664 = vmatprep.subr.mxu0 0.0
    %1665 = vmatpush2.msra.mxu0 0.0
    %1666 = vmatprep.subr.mxu0 0.0
    %1667 = vmatpush2.msra.mxu0 0.0
    %1668 = vmatprep.subr.mxu0 0.0
    %1669 = vmatpush2.msra.mxu0 0.0
    %1670 = vmatprep.subr.mxu0 0.0
    %1671 = vmatpush2.msra.mxu0 0.0
    %1672 = vmatprep.subr.mxu0 0.0
    %1673 = vmatpush2.msra.mxu0 0.0
    %1674 = vmatprep.subr.mxu0 0.0
    %1675 = vmatpush2.msra.mxu0 0.0
    %1676 = vmatprep.subr.mxu0 0.0
    %1677 = vmatpush2.msra.mxu0 0.0
    %1678 = vmatprep.subr.mxu0 0.0
    %1679 = vmatpush2.msra.mxu0 0.0
    %1680 = vmatprep.subr.mxu0 0.0
    %1681 = vmatpush2.msra.mxu0 0.0
    %1682 = vmatprep.subr.mxu0 0.0
    %1683 = vmatpush2.msra.mxu0 0.0
    %1684 = vmatprep.subr.mxu0 0.0
    %1685 = vmatpush2.msra.mxu0 0.0
    %1686 = vmatprep.subr.mxu0 0.0
    %1687 = vmatpush2.msra.mxu0 0.0
    %1688 = vmatprep.subr.mxu0 0.0
    %1689 = vmatpush2.msra.mxu0 0.0
    %1690 = vmatprep.subr.mxu0 0.0
    %1691 = vmatpush2.msra.mxu0 0.0
    %1692 = vmatprep.mubr.f32.mxu0 0.0
    %1693 = vmatmul.mubr.f32.gmra.mxu0 %v1623
    %v1694 = vpop.f32.mrf.mxu0
    %v1695 = vadd.f32 %v1620, %v1694
    %v1696 = vpop.f32.mrf.mxu0
    %1697 = vmatprep.mubr.f32.mxu0 0.0
    %1698 = vmatmul.mubr.f32.gmra.mxu0 %v1626
    %v1699 = vpop.f32.mrf.mxu0
    %v1700 = vadd.f32 %v1620, %v1699
    %v1701 = vpop.f32.mrf.mxu0
    %1702 = vdwg.mxu0
    %1703 = vst.msk [vmem:[#allocation8] sm:$0xff] %vm74, %v1695
    %1704 = vst.msk [vmem:[#allocation8 + $0x8] sm:$0xff] %vm74, %v1700
    // Predicated region
    $region30: #{tpu_custom_call.1} parent=1 // pred_check
      _
    $region31: #{tpu_custom_call.1} parent=1 // pred_check_branch
      %1706 = sbr.rel (0) target = $region33
    $region32: #{tpu_custom_call.1} parent=1 // pred_region
      %s1708 = ssub.s32 256, 256
      %1709 = vsyncadd [#allocation4], %s1708
      %s1710 = sshll.u32 [#allocation8], 4
      %s1711 = int_to_ptr.vmem [resolvable:$true] %s1710
      %1716 = dma.vmem_to_hbm [thread:$0]  %s1711, 256, %s4, [#allocation4], 128, 128, 8
    $region33: #{tpu_custom_call.1} parent=1 // pred_fallthru
      _
    // Predicated region
    $region34: #{tpu_custom_call.1} parent=1 // pred_check
      _
    $region35: #{tpu_custom_call.1} parent=1 // pred_check_branch
      %1718 = sbr.rel (0) target = $region37
    $region36: #{tpu_custom_call.1} parent=1 // pred_region
      %1719 = dma.done [#allocation4], 256
    $region37: #{tpu_custom_call.1} parent=1 // pred_fallthru
      _
    %1720 = vsyncpa [#allocation3], 1
    %1721 = vsyncpa [#allocation6], 1
    %1722 = vsyncpa [#allocation4], 1

</llo_original>
